<compile_context>
chip_gen: v7x
topology: tpu7x:2x2x1
jax: 0.10.0
libtpu: 0.0.40
codegen_flags: <defaults>
</compile_context>

<pallas_src>
import functools

import jax
import jax.numpy as jnp
from jax import lax
from jax.experimental import pallas as pl
from jax.experimental.pallas import tpu as pltpu


def _tree_sum(xs):
    """Balanced pairwise sum (keeps the accumulation chain short for the LLO scheduler)."""
    xs = list(xs)
    while len(xs) > 1:
        nxt = [xs[i] + xs[i + 1] for i in range(0, len(xs) - 1, 2)]
        if len(xs) % 2:
            nxt.append(xs[-1])
        xs = nxt
    return xs[0]


def spatial_gate_kernel(w_ref, p_ref, mask_ref, x_ref, out_ref, pool_scr,
                        *, TN, C, CC, HW, W, K, LPAD, PW1, PADLEN):
    """One grid step = TN batch instances.

    w_ref   : SMEM (2*K*K,) scalar prefetch; [0:K*K] max-branch weights,
              [K*K:2*K*K] mean-branch weights pre-scaled by 1/C (kernel uses the channel SUM).
    p_ref   : SMEM (3,) scalar prefetch; [conv_bias, in_gamma, in_beta].
    mask_ref: VMEM (K, HW) f32 column-validity mask per horizontal tap offset j.
    x_ref   : VMEM (TN, C, HW) input block, native dtype, lane-dense.
    out_ref : VMEM (TN, C, HW) output block.
    pool_scr: VMEM (2, 2, PADLEN) f32 ping-pong zero-padded flat pooled maps [max; sum].
    """
    KK = K * K
    n_chunks = C // CC

    # Zero only the conv-padding regions (the interior is fully rewritten every instance).
    # Done per grid step -- NOT guarded on program_id(0)==0 -- so it remains correct when the
    # "parallel" batch axis is sharded across TensorCores (each core has its own scratch).
    if LPAD > 0:
        pool_scr[:, :, 0:LPAD] = jnp.zeros((2, 2, LPAD), jnp.float32)
    if PW1 > 0:
        pool_scr[:, :, LPAD + HW:PADLEN] = jnp.zeros((2, 2, PW1), jnp.float32)

    # Column masks depend only on j; load each row once (hoisted out of all loops).
    col_masks = [mask_ref[j:j + 1, :] for j in range(K)]
    bias = p_ref[0]
    gamma = p_ref[1]
    beta = p_ref[2]

    def instance(t, carry):
        slot = t % 2  # ping-pong scratch slot: no WAR serialization between instances

        # Fused ChannelPool: one strip-mined pass over channels -> single x load for the pool.
        def pool_body(ci, mx_sm):
            mx, sm = mx_sm
            off = pl.multiple_of(ci * CC, CC)
            chunk = x_ref[t, pl.ds(off, CC), :]                            # (CC, HW) native dtype
            mx = jnp.maximum(mx, jnp.max(chunk, axis=0, keepdims=True).astype(jnp.float32))
            sm = sm + jnp.sum(chunk, axis=0, keepdims=True, dtype=jnp.float32)
            return mx, sm

        mx0 = jnp.full((1, HW), -jnp.inf, dtype=jnp.float32)
        sm0 = jnp.zeros((1, HW), jnp.float32)
        mx, sm = lax.fori_loop(0, n_chunks, pool_body, (mx0, sm0),
                               unroll=True if n_chunks <= 8 else 4)

        # Write pooled maps into the zero-padded flat scratch (lane-aligned interior at LPAD).
        pool_scr[slot, 0:1, LPAD:LPAD + HW] = mx
        pool_scr[slot, 1:2, LPAD:LPAD + HW] = sm
        pmax = pool_scr[slot, 0:1, :]                                      # (1, PADLEN) f32
        psum = pool_scr[slot, 1:2, :]                                      # (1, PADLEN) f32

        # KxK conv as lane-shifted MACs on the flat padded pooled maps.  Bias seeds the
        # accumulator; each j builds an independent partial (ILP), masked once per j.
        # TODO(synk): for very small C a pltpu.roll-based (H+2P,128) layout would make all tap
        # loads lane-aligned; at C >= ~64 the conv is HBM-hidden so the flat form is kept.
        parts = [jnp.zeros((1, HW), jnp.float32) + bias]
        for j in range(K):
            pj = None
            for i in range(K):
                s = LPAD - PW1 + i * W + j                                 # static lane offset
                tap = (w_ref[i * K + j] * pmax[:, s:s + HW]
                       + w_ref[KK + i * K + j] * psum[:, s:s + HW])
                pj = tap if pj is None else pj + tap
            parts.append(pj * col_masks[j])
        acc = _tree_sum(parts)                                             # (1, HW) conv output

        # InstanceNorm2d(1, eps=1e-5, affine=True): per-instance stats, biased variance.
        mu = jnp.mean(acc, keepdims=True)                                  # (1, 1)
        d = acc - mu
        var = jnp.mean(d * d, keepdims=True)
        y = gamma * (d * lax.rsqrt(var + 1e-5)) + beta

        # Sigmoid gate, broadcast over channels; multiply/store lane-dense in native dtype.
        gate = jax.nn.sigmoid(y)                                           # (1, HW) f32
        xb = x_ref[t]                                                      # (C, HW) native dtype
        out_ref[t] = (xb * gate.astype(xb.dtype)).astype(out_ref.dtype)
        return carry

    lax.fori_loop(0, TN, instance, None, unroll=(TN <= 4))


def _vmem_capacity_bytes():
    """Physical VMEM of the current generation (per TensorCore); conservative fallback."""
    try:
        info = pltpu.get_tpu_info()
        cap = getattr(info, "vmem_capacity_bytes", None)
        if cap:
            return int(cap)
    except Exception:
        pass
    return 64 << 20  # v7x per-TC VMEM; safe lower bound for v5e/v6e too


def _pick_batch_tile(n, c, hw, itemsize, block_budget_bytes):
    """Largest divisor of n whose (in + out), double-buffered block fits the budget, while
    keeping at least 2 grid steps (so v7x's two TensorCores both get work)."""
    per_inst = 2 * 2 * c * hw * itemsize
    cap = n // 2 if n >= 2 else n
    tn = 1
    for cand in range(1, max(cap, 1) + 1):
        if n % cand == 0 and cand * per_inst <= block_budget_bytes:
            tn = cand
    return tn


def _pick_channel_chunk(c, itemsize):
    """Sublane-sized channel chunk for the fused pool pass (8 rows f32, 16 rows bf16, ...)."""
    target = 8 * max(1, 4 // max(itemsize, 1))
    cc = 1
    for cand in range(1, min(c, target) + 1):
        if c % cand == 0:
            cc = cand
    return cc


def spatial_gate(x, conv_w, conv_b, in_gamma, in_beta, kernel_size=7):
    """x: (N, C, H, W); conv_w: (1, 2, K, K); conv_b / in_gamma / in_beta: (1,)."""
    N, C, H, W = x.shape
    K = kernel_size
    P = (K - 1) // 2
    HW = H * W

    # Lane-dense view of x (free contiguous reshape in the wrapper).
    x_flat = x.reshape(N, C, HW)

    # Conv weights: max branch as-is; mean branch pre-scaled by 1/C (kernel uses channel sum).
    w_flat = jnp.concatenate([
        conv_w[0, 0].reshape(-1),
        (conv_w[0, 1] / C).reshape(-1),
    ]).astype(jnp.float32)                                                    # (2*K*K,)
    params = jnp.concatenate([conv_b, in_gamma, in_beta]).astype(jnp.float32)  # (3,)

    # Column-validity masks for each horizontal tap offset j (left/right conv zero padding in the
    # flat layout); the top/bottom padding is handled by flat zero padding inside the kernel.
    col = jnp.arange(HW, dtype=jnp.int32) % W
    masks = jnp.stack(
        [((col + (j - P) >= 0) & (col + (j - P) < W)) for j in range(K)]
    ).astype(jnp.float32)                                                     # (K, HW)

    # Flat-padding geometry: left pad rounded up to a lane-aligned (128) offset.
    PW1 = P * (W + 1)
    LPAD = -(-PW1 // 128) * 128 if PW1 > 0 else 0
    PADLEN = LPAD + HW + PW1

    # Generation-aware VMEM budgets: v5e/v6e (128 MiB) -> ~48 MiB blocks / 96 MiB limit;
    # v7x (64 MiB) -> ~24 MiB blocks / 48 MiB limit.  Block budget is half the limit, which
    # leaves headroom for the masks block, pool scratch and Mosaic internal scratch.
    vmem_cap = _vmem_capacity_bytes()
    block_budget = (vmem_cap * 3) // 8
    vmem_limit = (vmem_cap * 3) // 4

    TN = _pick_batch_tile(N, C, HW, x.dtype.itemsize, block_budget)
    CC = _pick_channel_chunk(C, x.dtype.itemsize)

    kernel = functools.partial(
        spatial_gate_kernel,
        TN=TN, C=C, CC=CC, HW=HW, W=W, K=K, LPAD=LPAD, PW1=PW1, PADLEN=PADLEN)

    # TODO(synk): if callers can donate x, input_output_aliases would halve the HBM footprint of
    # the activation (most useful on v5e's 16 GiB HBM); left off to keep call semantics unchanged.
    out_flat = pl.pallas_call(
        kernel,
        out_shape=jax.ShapeDtypeStruct((N, C, HW), x.dtype),
        grid_spec=pltpu.PrefetchScalarGridSpec(
            num_scalar_prefetch=2,
            grid=(N // TN,),
            in_specs=[
                pl.BlockSpec((K, HW), lambda n, w, p: (0, 0)),         # column masks (constant)
                pl.BlockSpec((TN, C, HW), lambda n, w, p: (n, 0, 0)),  # x (lane-dense)
            ],
            out_specs=pl.BlockSpec((TN, C, HW), lambda n, w, p: (n, 0, 0)),
            scratch_shapes=[pltpu.VMEM((2, 2, PADLEN), jnp.float32)],  # ping-pong pooled maps
        ),
        compiler_params=pltpu.CompilerParams(
            dimension_semantics=("parallel",),   # batch steps shard across v7x's 2 TCs
            vmem_limit_bytes=vmem_limit),
    )(w_flat, params, masks, x_flat)

    return out_flat.reshape(N, C, H, W)


def spatial_gate_ref(x, conv_w, conv_b, gamma, beta, kernel_size=7):
    """Pure-JAX reference matching the PyTorch module semantics."""
    N, C, H, W = x.shape
    K = kernel_size
    P = (K - 1) // 2
    mx = jnp.max(x, axis=1)
    mn = jnp.mean(x, axis=1)
    pooled = jnp.stack([mx, mn], axis=1)                                  # (N, 2, H, W)
    pp = jnp.pad(pooled, ((0, 0), (0, 0), (P, P), (P, P)))
    conv = jnp.zeros((N, H, W), jnp.float32) + conv_b[0]
    for i in range(K):
        for j in range(K):
            conv = conv + (conv_w[0, 0, i, j] * pp[:, 0, i:i + H, j:j + W]
                           + conv_w[0, 1, i, j] * pp[:, 1, i:i + H, j:j + W])
    mu = conv.mean(axis=(1, 2), keepdims=True)
    var = ((conv - mu) ** 2).mean(axis=(1, 2), keepdims=True)
    y = gamma[0] * (conv - mu) * jax.lax.rsqrt(var + 1e-5) + beta[0]
    gate = jax.nn.sigmoid(y)
    return x * gate[:, None, :, :]


if __name__ == "__main__":
    key = jax.random.PRNGKey(0)
    k_x, k_w, k_b = jax.random.split(key, 3)

    N, C, H, W = 2, 4, 16, 16
    K = 7

    x = jax.random.normal(k_x, (N, C, H, W), jnp.float32)

    # Deterministic synthetic parameters (shapes per nn.Conv2d(2, 1, 7, bias=True) and
    # nn.InstanceNorm2d(1, affine=True) default init: gamma=1, beta=0).
    fan_in = 2 * K * K
    bound = 1.0 / (fan_in ** 0.5)
    conv_w = jax.random.uniform(k_w, (1, 2, K, K), jnp.float32, -bound, bound)
    conv_b = jax.random.uniform(k_b, (1,), jnp.float32, -bound, bound)
    in_gamma = jnp.ones((1,), jnp.float32)
    in_beta = jnp.zeros((1,), jnp.float32)

    out = spatial_gate(x, conv_w, conv_b, in_gamma, in_beta, kernel_size=K)
    jax.block_until_ready(out)
    assert out.shape == (N, C, H, W) and out.dtype == x.dtype

    ref = spatial_gate_ref(x, conv_w, conv_b, in_gamma, in_beta, kernel_size=K)
    assert jnp.allclose(out, ref, rtol=1e-4, atol=1e-4), "kernel/reference mismatch"

    print("KERNEL_OK")
</pallas_src>

<mosaic_0001>
module attributes {stable_mosaic.version = 11 : i64} {
  func.func @spatial_gate_kernel(%arg0: i32, %arg1: memref<98xf32, #tpu.memory_space<smem>>, %arg2: memref<3xf32, #tpu.memory_space<smem>>, %arg3: memref<7x256xf32, #tpu.memory_space<vmem>>, %arg4: memref<1x4x256xf32, #tpu.memory_space<vmem>>, %arg5: memref<1x4x256xf32, #tpu.memory_space<vmem>>, %arg6: memref<2x2x435xf32, #tpu.memory_space<vmem>>) attributes {dimension_semantics = [#tpu.dimension_semantics<parallel>], iteration_bounds = array<i64: 2>, scalar_prefetch = 2 : i64, scratch_operands = 1 : i64, tpu.core_type = #tpu.core_type<tc>, window_params = [{pipeline_mode = #tpu.pipeline_mode<synchronous>, transform_indices = @transform_0, window_bounds = array<i64: 7, 256>}, {transform_indices = @transform_1, window_bounds = array<i64: 1, 4, 256>}, {transform_indices = @transform_2, window_bounds = array<i64: 1, 4, 256>}]} {
    %cst = arith.constant 0.000000e+00 : f32
    %0 = vector.broadcast %cst : f32 to vector<2x2x128xf32>
    %c0 = arith.constant 0 : index
    %c0_0 = arith.constant 0 : index
    %c0_1 = arith.constant 0 : index
    %1 = vector.load %arg6[%c0, %c0_0, %c0_1] : memref<2x2x435xf32, #tpu.memory_space<vmem>>, vector<2x2x128xf32>
    tpu.vector_store %arg6[%c0, %c0_0, %c0_1], %0 {strides = array<i32>} : memref<2x2x435xf32, #tpu.memory_space<vmem>>, vector<2x2x128xf32>,
    %cst_2 = arith.constant 0.000000e+00 : f32
    %2 = vector.broadcast %cst_2 : f32 to vector<2x2x51xf32>
    %c0_3 = arith.constant 0 : index
    %c0_4 = arith.constant 0 : index
    %c384 = arith.constant 384 : index
    %3 = vector.load %arg6[%c0_3, %c0_4, %c384] : memref<2x2x435xf32, #tpu.memory_space<vmem>>, vector<2x2x51xf32>
    tpu.vector_store %arg6[%c0_3, %c0_4, %c384], %2 {strides = array<i32>} : memref<2x2x435xf32, #tpu.memory_space<vmem>>, vector<2x2x51xf32>,
    %c0_5 = arith.constant 0 : index
    %c0_6 = arith.constant 0 : index
    %4 = vector.load %arg3[%c0_5, %c0_6] : memref<7x256xf32, #tpu.memory_space<vmem>>, vector<1x256xf32>
    %c1 = arith.constant 1 : index
    %c0_7 = arith.constant 0 : index
    %5 = vector.load %arg3[%c1, %c0_7] : memref<7x256xf32, #tpu.memory_space<vmem>>, vector<1x256xf32>
    %c2 = arith.constant 2 : index
    %c0_8 = arith.constant 0 : index
    %6 = vector.load %arg3[%c2, %c0_8] : memref<7x256xf32, #tpu.memory_space<vmem>>, vector<1x256xf32>
    %c3 = arith.constant 3 : index
    %c0_9 = arith.constant 0 : index
    %7 = vector.load %arg3[%c3, %c0_9] : memref<7x256xf32, #tpu.memory_space<vmem>>, vector<1x256xf32>
    %c4 = arith.constant 4 : index
    %c0_10 = arith.constant 0 : index
    %8 = vector.load %arg3[%c4, %c0_10] : memref<7x256xf32, #tpu.memory_space<vmem>>, vector<1x256xf32>
    %c5 = arith.constant 5 : index
    %c0_11 = arith.constant 0 : index
    %9 = vector.load %arg3[%c5, %c0_11] : memref<7x256xf32, #tpu.memory_space<vmem>>, vector<1x256xf32>
    %c6 = arith.constant 6 : index
    %c0_12 = arith.constant 0 : index
    %10 = vector.load %arg3[%c6, %c0_12] : memref<7x256xf32, #tpu.memory_space<vmem>>, vector<1x256xf32>
    %c0_13 = arith.constant 0 : index
    %11 = memref.load %arg2[%c0_13] : memref<3xf32, #tpu.memory_space<smem>>
    %c1_14 = arith.constant 1 : index
    %12 = memref.load %arg2[%c1_14] : memref<3xf32, #tpu.memory_space<smem>>
    %c2_15 = arith.constant 2 : index
    %13 = memref.load %arg2[%c2_15] : memref<3xf32, #tpu.memory_space<smem>>
    %c0_i32 = arith.constant 0 : i32
    %c2_i32 = arith.constant 2 : i32
    %c0_i32_16 = arith.constant 0 : i32
    %14 = arith.cmpi eq, %c2_i32, %c0_i32_16 : i32
    %c1_i32 = arith.constant 1 : i32
    %15 = arith.select %14, %c1_i32, %c2_i32 : i32
    %16 = arith.remsi %c0_i32, %15 : i32
    %c0_i32_17 = arith.constant 0 : i32
    %17 = arith.cmpi ne, %16, %c0_i32_17 : i32
    %c0_i32_18 = arith.constant 0 : i32
    %18 = arith.cmpi slt, %16, %c0_i32_18 : i32
    %c0_i32_19 = arith.constant 0 : i32
    %19 = arith.cmpi slt, %15, %c0_i32_19 : i32
    %20 = arith.xori %18, %19 : i1
    %21 = arith.andi %20, %17 : i1
    %22 = arith.addi %16, %15 : i32
    %23 = arith.select %21, %22, %16 : i32
    %cst_20 = arith.constant 0xFF800000 : f32
    %24 = vector.broadcast %cst_20 : f32 to vector<1x256xf32>
    %cst_21 = arith.constant 0.000000e+00 : f32
    %25 = vector.broadcast %cst_21 : f32 to vector<1x256xf32>
    %c0_i32_22 = arith.constant 0 : i32
    %c4_i32 = arith.constant 4 : i32
    %26 = arith.muli %c0_i32_22, %c4_i32 : i32
    %27 = tpu.assume_multiple %26, 4 : i32
    %28 = arith.index_cast %c0_i32 : i32 to index
    %29 = arith.index_cast %27 : i32 to index
    %c0_23 = arith.constant 0 : index
    %30 = vector.load %arg4[%28, %29, %c0_23] : memref<1x4x256xf32, #tpu.memory_space<vmem>>, vector<1x4x256xf32>
    %31 = vector.shape_cast %30 : vector<1x4x256xf32> to vector<4x256xf32>
    %cst_24 = arith.constant dense<0xFF800000> : vector<256xf32>
    %32 = vector.multi_reduction <maximumf>, %31, %cst_24 [0] : vector<4x256xf32> to vector<256xf32>
    %33 = vector.shape_cast %32 : vector<256xf32> to vector<1x256xf32>
    %34 = arith.maximumf %24, %33 : vector<1x256xf32>
    %cst_25 = arith.constant dense<0.000000e+00> : vector<256xf32>
    %35 = vector.multi_reduction <add>, %31, %cst_25 [0] : vector<4x256xf32> to vector<256xf32>
    %36 = vector.shape_cast %35 : vector<256xf32> to vector<1x256xf32>
    %37 = arith.addf %25, %36 : vector<1x256xf32>
    %c1_i32_26 = arith.constant 1 : i32
    %38 = arith.index_cast %23 : i32 to index
    %c0_27 = arith.constant 0 : index
    %c128 = arith.constant 128 : index
    %39 = vector.load %arg6[%38, %c0_27, %c128] : memref<2x2x435xf32, #tpu.memory_space<vmem>>, vector<1x1x256xf32>
    %40 = vector.shape_cast %39 : vector<1x1x256xf32> to vector<1x256xf32>
    %41 = vector.shape_cast %34 : vector<1x256xf32> to vector<1x1x256xf32>
    tpu.vector_store %arg6[%38, %c0_27, %c128], %41 {strides = array<i32>} : memref<2x2x435xf32, #tpu.memory_space<vmem>>, vector<1x1x256xf32>,
    %42 = arith.index_cast %23 : i32 to index
    %c1_28 = arith.constant 1 : index
    %c128_29 = arith.constant 128 : index
    %43 = vector.load %arg6[%42, %c1_28, %c128_29] : memref<2x2x435xf32, #tpu.memory_space<vmem>>, vector<1x1x256xf32>
    %44 = vector.shape_cast %43 : vector<1x1x256xf32> to vector<1x256xf32>
    %45 = vector.shape_cast %37 : vector<1x256xf32> to vector<1x1x256xf32>
    tpu.vector_store %arg6[%42, %c1_28, %c128_29], %45 {strides = array<i32>} : memref<2x2x435xf32, #tpu.memory_space<vmem>>, vector<1x1x256xf32>,
    %46 = arith.index_cast %23 : i32 to index
    %c0_30 = arith.constant 0 : index
    %c0_31 = arith.constant 0 : index
    %47 = vector.load %arg6[%46, %c0_30, %c0_31] : memref<2x2x435xf32, #tpu.memory_space<vmem>>, vector<1x1x435xf32>
    %48 = vector.shape_cast %47 : vector<1x1x435xf32> to vector<1x435xf32>
    %49 = arith.index_cast %23 : i32 to index
    %c1_32 = arith.constant 1 : index
    %c0_33 = arith.constant 0 : index
    %50 = vector.load %arg6[%49, %c1_32, %c0_33] : memref<2x2x435xf32, #tpu.memory_space<vmem>>, vector<1x1x435xf32>
    %51 = vector.shape_cast %50 : vector<1x1x435xf32> to vector<1x435xf32>
    %cst_34 = arith.constant 0.000000e+00 : f32
    %52 = vector.broadcast %cst_34 : f32 to vector<1x256xf32>
    %53 = vector.broadcast %11 : f32 to vector<1x256xf32>
    %54 = arith.addf %52, %53 : vector<1x256xf32>
    %c0_35 = arith.constant 0 : index
    %55 = memref.load %arg1[%c0_35] : memref<98xf32, #tpu.memory_space<smem>>
    %56 = vector.extract_strided_slice %48 {offsets = [0, 77], sizes = [1, 256], strides = [1, 1]} : vector<1x435xf32> to vector<1x256xf32>
    %57 = vector.broadcast %55 : f32 to vector<1x256xf32>
    %58 = arith.mulf %57, %56 : vector<1x256xf32>
    %c49 = arith.constant 49 : index
    %59 = memref.load %arg1[%c49] : memref<98xf32, #tpu.memory_space<smem>>
    %60 = vector.extract_strided_slice %51 {offsets = [0, 77], sizes = [1, 256], strides = [1, 1]} : vector<1x435xf32> to vector<1x256xf32>
    %61 = vector.broadcast %59 : f32 to vector<1x256xf32>
    %62 = arith.mulf %61, %60 : vector<1x256xf32>
    %63 = arith.addf %58, %62 : vector<1x256xf32>
    %c7 = arith.constant 7 : index
    %64 = memref.load %arg1[%c7] : memref<98xf32, #tpu.memory_space<smem>>
    %65 = vector.extract_strided_slice %48 {offsets = [0, 93], sizes = [1, 256], strides = [1, 1]} : vector<1x435xf32> to vector<1x256xf32>
    %66 = vector.broadcast %64 : f32 to vector<1x256xf32>
    %67 = arith.mulf %66, %65 : vector<1x256xf32>
    %c56 = arith.constant 56 : index
    %68 = memref.load %arg1[%c56] : memref<98xf32, #tpu.memory_space<smem>>
    %69 = vector.extract_strided_slice %51 {offsets = [0, 93], sizes = [1, 256], strides = [1, 1]} : vector<1x435xf32> to vector<1x256xf32>
    %70 = vector.broadcast %68 : f32 to vector<1x256xf32>
    %71 = arith.mulf %70, %69 : vector<1x256xf32>
    %72 = arith.addf %67, %71 : vector<1x256xf32>
    %73 = arith.addf %63, %72 : vector<1x256xf32>
    %c14 = arith.constant 14 : index
    %74 = memref.load %arg1[%c14] : memref<98xf32, #tpu.memory_space<smem>>
    %75 = vector.extract_strided_slice %48 {offsets = [0, 109], sizes = [1, 256], strides = [1, 1]} : vector<1x435xf32> to vector<1x256xf32>
    %76 = vector.broadcast %74 : f32 to vector<1x256xf32>
    %77 = arith.mulf %76, %75 : vector<1x256xf32>
    %c63 = arith.constant 63 : index
    %78 = memref.load %arg1[%c63] : memref<98xf32, #tpu.memory_space<smem>>
    %79 = vector.extract_strided_slice %51 {offsets = [0, 109], sizes = [1, 256], strides = [1, 1]} : vector<1x435xf32> to vector<1x256xf32>
    %80 = vector.broadcast %78 : f32 to vector<1x256xf32>
    %81 = arith.mulf %80, %79 : vector<1x256xf32>
    %82 = arith.addf %77, %81 : vector<1x256xf32>
    %83 = arith.addf %73, %82 : vector<1x256xf32>
    %c21 = arith.constant 21 : index
    %84 = memref.load %arg1[%c21] : memref<98xf32, #tpu.memory_space<smem>>
    %85 = vector.extract_strided_slice %48 {offsets = [0, 125], sizes = [1, 256], strides = [1, 1]} : vector<1x435xf32> to vector<1x256xf32>
    %86 = vector.broadcast %84 : f32 to vector<1x256xf32>
    %87 = arith.mulf %86, %85 : vector<1x256xf32>
    %c70 = arith.constant 70 : index
    %88 = memref.load %arg1[%c70] : memref<98xf32, #tpu.memory_space<smem>>
    %89 = vector.extract_strided_slice %51 {offsets = [0, 125], sizes = [1, 256], strides = [1, 1]} : vector<1x435xf32> to vector<1x256xf32>
    %90 = vector.broadcast %88 : f32 to vector<1x256xf32>
    %91 = arith.mulf %90, %89 : vector<1x256xf32>
    %92 = arith.addf %87, %91 : vector<1x256xf32>
    %93 = arith.addf %83, %92 : vector<1x256xf32>
    %c28 = arith.constant 28 : index
    %94 = memref.load %arg1[%c28] : memref<98xf32, #tpu.memory_space<smem>>
    %95 = vector.extract_strided_slice %48 {offsets = [0, 141], sizes = [1, 256], strides = [1, 1]} : vector<1x435xf32> to vector<1x256xf32>
    %96 = vector.broadcast %94 : f32 to vector<1x256xf32>
    %97 = arith.mulf %96, %95 : vector<1x256xf32>
    %c77 = arith.constant 77 : index
    %98 = memref.load %arg1[%c77] : memref<98xf32, #tpu.memory_space<smem>>
    %99 = vector.extract_strided_slice %51 {offsets = [0, 141], sizes = [1, 256], strides = [1, 1]} : vector<1x435xf32> to vector<1x256xf32>
    %100 = vector.broadcast %98 : f32 to vector<1x256xf32>
    %101 = arith.mulf %100, %99 : vector<1x256xf32>
    %102 = arith.addf %97, %101 : vector<1x256xf32>
    %103 = arith.addf %93, %102 : vector<1x256xf32>
    %c35 = arith.constant 35 : index
    %104 = memref.load %arg1[%c35] : memref<98xf32, #tpu.memory_space<smem>>
    %105 = vector.extract_strided_slice %48 {offsets = [0, 157], sizes = [1, 256], strides = [1, 1]} : vector<1x435xf32> to vector<1x256xf32>
    %106 = vector.broadcast %104 : f32 to vector<1x256xf32>
    %107 = arith.mulf %106, %105 : vector<1x256xf32>
    %c84 = arith.constant 84 : index
    %108 = memref.load %arg1[%c84] : memref<98xf32, #tpu.memory_space<smem>>
    %109 = vector.extract_strided_slice %51 {offsets = [0, 157], sizes = [1, 256], strides = [1, 1]} : vector<1x435xf32> to vector<1x256xf32>
    %110 = vector.broadcast %108 : f32 to vector<1x256xf32>
    %111 = arith.mulf %110, %109 : vector<1x256xf32>
    %112 = arith.addf %107, %111 : vector<1x256xf32>
    %113 = arith.addf %103, %112 : vector<1x256xf32>
    %c42 = arith.constant 42 : index
    %114 = memref.load %arg1[%c42] : memref<98xf32, #tpu.memory_space<smem>>
    %115 = vector.extract_strided_slice %48 {offsets = [0, 173], sizes = [1, 256], strides = [1, 1]} : vector<1x435xf32> to vector<1x256xf32>
    %116 = vector.broadcast %114 : f32 to vector<1x256xf32>
    %117 = arith.mulf %116, %115 : vector<1x256xf32>
    %c91 = arith.constant 91 : index
    %118 = memref.load %arg1[%c91] : memref<98xf32, #tpu.memory_space<smem>>
    %119 = vector.extract_strided_slice %51 {offsets = [0, 173], sizes = [1, 256], strides = [1, 1]} : vector<1x435xf32> to vector<1x256xf32>
    %120 = vector.broadcast %118 : f32 to vector<1x256xf32>
    %121 = arith.mulf %120, %119 : vector<1x256xf32>
    %122 = arith.addf %117, %121 : vector<1x256xf32>
    %123 = arith.addf %113, %122 : vector<1x256xf32>
    %124 = arith.mulf %123, %4 : vector<1x256xf32>
    %c1_36 = arith.constant 1 : index
    %125 = memref.load %arg1[%c1_36] : memref<98xf32, #tpu.memory_space<smem>>
    %126 = vector.extract_strided_slice %48 {offsets = [0, 78], sizes = [1, 256], strides = [1, 1]} : vector<1x435xf32> to vector<1x256xf32>
    %127 = vector.broadcast %125 : f32 to vector<1x256xf32>
    %128 = arith.mulf %127, %126 : vector<1x256xf32>
    %c50 = arith.constant 50 : index
    %129 = memref.load %arg1[%c50] : memref<98xf32, #tpu.memory_space<smem>>
    %130 = vector.extract_strided_slice %51 {offsets = [0, 78], sizes = [1, 256], strides = [1, 1]} : vector<1x435xf32> to vector<1x256xf32>
    %131 = vector.broadcast %129 : f32 to vector<1x256xf32>
    %132 = arith.mulf %131, %130 : vector<1x256xf32>
    %133 = arith.addf %128, %132 : vector<1x256xf32>
    %c8 = arith.constant 8 : index
    %134 = memref.load %arg1[%c8] : memref<98xf32, #tpu.memory_space<smem>>
    %135 = vector.extract_strided_slice %48 {offsets = [0, 94], sizes = [1, 256], strides = [1, 1]} : vector<1x435xf32> to vector<1x256xf32>
    %136 = vector.broadcast %134 : f32 to vector<1x256xf32>
    %137 = arith.mulf %136, %135 : vector<1x256xf32>
    %c57 = arith.constant 57 : index
    %138 = memref.load %arg1[%c57] : memref<98xf32, #tpu.memory_space<smem>>
    %139 = vector.extract_strided_slice %51 {offsets = [0, 94], sizes = [1, 256], strides = [1, 1]} : vector<1x435xf32> to vector<1x256xf32>
    %140 = vector.broadcast %138 : f32 to vector<1x256xf32>
    %141 = arith.mulf %140, %139 : vector<1x256xf32>
    %142 = arith.addf %137, %141 : vector<1x256xf32>
    %143 = arith.addf %133, %142 : vector<1x256xf32>
    %c15 = arith.constant 15 : index
    %144 = memref.load %arg1[%c15] : memref<98xf32, #tpu.memory_space<smem>>
    %145 = vector.extract_strided_slice %48 {offsets = [0, 110], sizes = [1, 256], strides = [1, 1]} : vector<1x435xf32> to vector<1x256xf32>
    %146 = vector.broadcast %144 : f32 to vector<1x256xf32>
    %147 = arith.mulf %146, %145 : vector<1x256xf32>
    %c64 = arith.constant 64 : index
    %148 = memref.load %arg1[%c64] : memref<98xf32, #tpu.memory_space<smem>>
    %149 = vector.extract_strided_slice %51 {offsets = [0, 110], sizes = [1, 256], strides = [1, 1]} : vector<1x435xf32> to vector<1x256xf32>
    %150 = vector.broadcast %148 : f32 to vector<1x256xf32>
    %151 = arith.mulf %150, %149 : vector<1x256xf32>
    %152 = arith.addf %147, %151 : vector<1x256xf32>
    %153 = arith.addf %143, %152 : vector<1x256xf32>
    %c22 = arith.constant 22 : index
    %154 = memref.load %arg1[%c22] : memref<98xf32, #tpu.memory_space<smem>>
    %155 = vector.extract_strided_slice %48 {offsets = [0, 126], sizes = [1, 256], strides = [1, 1]} : vector<1x435xf32> to vector<1x256xf32>
    %156 = vector.broadcast %154 : f32 to vector<1x256xf32>
    %157 = arith.mulf %156, %155 : vector<1x256xf32>
    %c71 = arith.constant 71 : index
    %158 = memref.load %arg1[%c71] : memref<98xf32, #tpu.memory_space<smem>>
    %159 = vector.extract_strided_slice %51 {offsets = [0, 126], sizes = [1, 256], strides = [1, 1]} : vector<1x435xf32> to vector<1x256xf32>
    %160 = vector.broadcast %158 : f32 to vector<1x256xf32>
    %161 = arith.mulf %160, %159 : vector<1x256xf32>
    %162 = arith.addf %157, %161 : vector<1x256xf32>
    %163 = arith.addf %153, %162 : vector<1x256xf32>
    %c29 = arith.constant 29 : index
    %164 = memref.load %arg1[%c29] : memref<98xf32, #tpu.memory_space<smem>>
    %165 = vector.extract_strided_slice %48 {offsets = [0, 142], sizes = [1, 256], strides = [1, 1]} : vector<1x435xf32> to vector<1x256xf32>
    %166 = vector.broadcast %164 : f32 to vector<1x256xf32>
    %167 = arith.mulf %166, %165 : vector<1x256xf32>
    %c78 = arith.constant 78 : index
    %168 = memref.load %arg1[%c78] : memref<98xf32, #tpu.memory_space<smem>>
    %169 = vector.extract_strided_slice %51 {offsets = [0, 142], sizes = [1, 256], strides = [1, 1]} : vector<1x435xf32> to vector<1x256xf32>
    %170 = vector.broadcast %168 : f32 to vector<1x256xf32>
    %171 = arith.mulf %170, %169 : vector<1x256xf32>
    %172 = arith.addf %167, %171 : vector<1x256xf32>
    %173 = arith.addf %163, %172 : vector<1x256xf32>
    %c36 = arith.constant 36 : index
    %174 = memref.load %arg1[%c36] : memref<98xf32, #tpu.memory_space<smem>>
    %175 = vector.extract_strided_slice %48 {offsets = [0, 158], sizes = [1, 256], strides = [1, 1]} : vector<1x435xf32> to vector<1x256xf32>
    %176 = vector.broadcast %174 : f32 to vector<1x256xf32>
    %177 = arith.mulf %176, %175 : vector<1x256xf32>
    %c85 = arith.constant 85 : index
    %178 = memref.load %arg1[%c85] : memref<98xf32, #tpu.memory_space<smem>>
    %179 = vector.extract_strided_slice %51 {offsets = [0, 158], sizes = [1, 256], strides = [1, 1]} : vector<1x435xf32> to vector<1x256xf32>
    %180 = vector.broadcast %178 : f32 to vector<1x256xf32>
    %181 = arith.mulf %180, %179 : vector<1x256xf32>
    %182 = arith.addf %177, %181 : vector<1x256xf32>
    %183 = arith.addf %173, %182 : vector<1x256xf32>
    %c43 = arith.constant 43 : index
    %184 = memref.load %arg1[%c43] : memref<98xf32, #tpu.memory_space<smem>>
    %185 = vector.extract_strided_slice %48 {offsets = [0, 174], sizes = [1, 256], strides = [1, 1]} : vector<1x435xf32> to vector<1x256xf32>
    %186 = vector.broadcast %184 : f32 to vector<1x256xf32>
    %187 = arith.mulf %186, %185 : vector<1x256xf32>
    %c92 = arith.constant 92 : index
    %188 = memref.load %arg1[%c92] : memref<98xf32, #tpu.memory_space<smem>>
    %189 = vector.extract_strided_slice %51 {offsets = [0, 174], sizes = [1, 256], strides = [1, 1]} : vector<1x435xf32> to vector<1x256xf32>
    %190 = vector.broadcast %188 : f32 to vector<1x256xf32>
    %191 = arith.mulf %190, %189 : vector<1x256xf32>
    %192 = arith.addf %187, %191 : vector<1x256xf32>
    %193 = arith.addf %183, %192 : vector<1x256xf32>
    %194 = arith.mulf %193, %5 : vector<1x256xf32>
    %c2_37 = arith.constant 2 : index
    %195 = memref.load %arg1[%c2_37] : memref<98xf32, #tpu.memory_space<smem>>
    %196 = vector.extract_strided_slice %48 {offsets = [0, 79], sizes = [1, 256], strides = [1, 1]} : vector<1x435xf32> to vector<1x256xf32>
    %197 = vector.broadcast %195 : f32 to vector<1x256xf32>
    %198 = arith.mulf %197, %196 : vector<1x256xf32>
    %c51 = arith.constant 51 : index
    %199 = memref.load %arg1[%c51] : memref<98xf32, #tpu.memory_space<smem>>
    %200 = vector.extract_strided_slice %51 {offsets = [0, 79], sizes = [1, 256], strides = [1, 1]} : vector<1x435xf32> to vector<1x256xf32>
    %201 = vector.broadcast %199 : f32 to vector<1x256xf32>
    %202 = arith.mulf %201, %200 : vector<1x256xf32>
    %203 = arith.addf %198, %202 : vector<1x256xf32>
    %c9 = arith.constant 9 : index
    %204 = memref.load %arg1[%c9] : memref<98xf32, #tpu.memory_space<smem>>
    %205 = vector.extract_strided_slice %48 {offsets = [0, 95], sizes = [1, 256], strides = [1, 1]} : vector<1x435xf32> to vector<1x256xf32>
    %206 = vector.broadcast %204 : f32 to vector<1x256xf32>
    %207 = arith.mulf %206, %205 : vector<1x256xf32>
    %c58 = arith.constant 58 : index
    %208 = memref.load %arg1[%c58] : memref<98xf32, #tpu.memory_space<smem>>
    %209 = vector.extract_strided_slice %51 {offsets = [0, 95], sizes = [1, 256], strides = [1, 1]} : vector<1x435xf32> to vector<1x256xf32>
    %210 = vector.broadcast %208 : f32 to vector<1x256xf32>
    %211 = arith.mulf %210, %209 : vector<1x256xf32>
    %212 = arith.addf %207, %211 : vector<1x256xf32>
    %213 = arith.addf %203, %212 : vector<1x256xf32>
    %c16 = arith.constant 16 : index
    %214 = memref.load %arg1[%c16] : memref<98xf32, #tpu.memory_space<smem>>
    %215 = vector.extract_strided_slice %48 {offsets = [0, 111], sizes = [1, 256], strides = [1, 1]} : vector<1x435xf32> to vector<1x256xf32>
    %216 = vector.broadcast %214 : f32 to vector<1x256xf32>
    %217 = arith.mulf %216, %215 : vector<1x256xf32>
    %c65 = arith.constant 65 : index
    %218 = memref.load %arg1[%c65] : memref<98xf32, #tpu.memory_space<smem>>
    %219 = vector.extract_strided_slice %51 {offsets = [0, 111], sizes = [1, 256], strides = [1, 1]} : vector<1x435xf32> to vector<1x256xf32>
    %220 = vector.broadcast %218 : f32 to vector<1x256xf32>
    %221 = arith.mulf %220, %219 : vector<1x256xf32>
    %222 = arith.addf %217, %221 : vector<1x256xf32>
    %223 = arith.addf %213, %222 : vector<1x256xf32>
    %c23 = arith.constant 23 : index
    %224 = memref.load %arg1[%c23] : memref<98xf32, #tpu.memory_space<smem>>
    %225 = vector.extract_strided_slice %48 {offsets = [0, 127], sizes = [1, 256], strides = [1, 1]} : vector<1x435xf32> to vector<1x256xf32>
    %226 = vector.broadcast %224 : f32 to vector<1x256xf32>
    %227 = arith.mulf %226, %225 : vector<1x256xf32>
    %c72 = arith.constant 72 : index
    %228 = memref.load %arg1[%c72] : memref<98xf32, #tpu.memory_space<smem>>
    %229 = vector.extract_strided_slice %51 {offsets = [0, 127], sizes = [1, 256], strides = [1, 1]} : vector<1x435xf32> to vector<1x256xf32>
    %230 = vector.broadcast %228 : f32 to vector<1x256xf32>
    %231 = arith.mulf %230, %229 : vector<1x256xf32>
    %232 = arith.addf %227, %231 : vector<1x256xf32>
    %233 = arith.addf %223, %232 : vector<1x256xf32>
    %c30 = arith.constant 30 : index
    %234 = memref.load %arg1[%c30] : memref<98xf32, #tpu.memory_space<smem>>
    %235 = vector.extract_strided_slice %48 {offsets = [0, 143], sizes = [1, 256], strides = [1, 1]} : vector<1x435xf32> to vector<1x256xf32>
    %236 = vector.broadcast %234 : f32 to vector<1x256xf32>
    %237 = arith.mulf %236, %235 : vector<1x256xf32>
    %c79 = arith.constant 79 : index
    %238 = memref.load %arg1[%c79] : memref<98xf32, #tpu.memory_space<smem>>
    %239 = vector.extract_strided_slice %51 {offsets = [0, 143], sizes = [1, 256], strides = [1, 1]} : vector<1x435xf32> to vector<1x256xf32>
    %240 = vector.broadcast %238 : f32 to vector<1x256xf32>
    %241 = arith.mulf %240, %239 : vector<1x256xf32>
    %242 = arith.addf %237, %241 : vector<1x256xf32>
    %243 = arith.addf %233, %242 : vector<1x256xf32>
    %c37 = arith.constant 37 : index
    %244 = memref.load %arg1[%c37] : memref<98xf32, #tpu.memory_space<smem>>
    %245 = vector.extract_strided_slice %48 {offsets = [0, 159], sizes = [1, 256], strides = [1, 1]} : vector<1x435xf32> to vector<1x256xf32>
    %246 = vector.broadcast %244 : f32 to vector<1x256xf32>
    %247 = arith.mulf %246, %245 : vector<1x256xf32>
    %c86 = arith.constant 86 : index
    %248 = memref.load %arg1[%c86] : memref<98xf32, #tpu.memory_space<smem>>
    %249 = vector.extract_strided_slice %51 {offsets = [0, 159], sizes = [1, 256], strides = [1, 1]} : vector<1x435xf32> to vector<1x256xf32>
    %250 = vector.broadcast %248 : f32 to vector<1x256xf32>
    %251 = arith.mulf %250, %249 : vector<1x256xf32>
    %252 = arith.addf %247, %251 : vector<1x256xf32>
    %253 = arith.addf %243, %252 : vector<1x256xf32>
    %c44 = arith.constant 44 : index
    %254 = memref.load %arg1[%c44] : memref<98xf32, #tpu.memory_space<smem>>
    %255 = vector.extract_strided_slice %48 {offsets = [0, 175], sizes = [1, 256], strides = [1, 1]} : vector<1x435xf32> to vector<1x256xf32>
    %256 = vector.broadcast %254 : f32 to vector<1x256xf32>
    %257 = arith.mulf %256, %255 : vector<1x256xf32>
    %c93 = arith.constant 93 : index
    %258 = memref.load %arg1[%c93] : memref<98xf32, #tpu.memory_space<smem>>
    %259 = vector.extract_strided_slice %51 {offsets = [0, 175], sizes = [1, 256], strides = [1, 1]} : vector<1x435xf32> to vector<1x256xf32>
    %260 = vector.broadcast %258 : f32 to vector<1x256xf32>
    %261 = arith.mulf %260, %259 : vector<1x256xf32>
    %262 = arith.addf %257, %261 : vector<1x256xf32>
    %263 = arith.addf %253, %262 : vector<1x256xf32>
    %264 = arith.mulf %263, %6 : vector<1x256xf32>
    %c3_38 = arith.constant 3 : index
    %265 = memref.load %arg1[%c3_38] : memref<98xf32, #tpu.memory_space<smem>>
    %266 = vector.extract_strided_slice %48 {offsets = [0, 80], sizes = [1, 256], strides = [1, 1]} : vector<1x435xf32> to vector<1x256xf32>
    %267 = vector.broadcast %265 : f32 to vector<1x256xf32>
    %268 = arith.mulf %267, %266 : vector<1x256xf32>
    %c52 = arith.constant 52 : index
    %269 = memref.load %arg1[%c52] : memref<98xf32, #tpu.memory_space<smem>>
    %270 = vector.extract_strided_slice %51 {offsets = [0, 80], sizes = [1, 256], strides = [1, 1]} : vector<1x435xf32> to vector<1x256xf32>
    %271 = vector.broadcast %269 : f32 to vector<1x256xf32>
    %272 = arith.mulf %271, %270 : vector<1x256xf32>
    %273 = arith.addf %268, %272 : vector<1x256xf32>
    %c10 = arith.constant 10 : index
    %274 = memref.load %arg1[%c10] : memref<98xf32, #tpu.memory_space<smem>>
    %275 = vector.extract_strided_slice %48 {offsets = [0, 96], sizes = [1, 256], strides = [1, 1]} : vector<1x435xf32> to vector<1x256xf32>
    %276 = vector.broadcast %274 : f32 to vector<1x256xf32>
    %277 = arith.mulf %276, %275 : vector<1x256xf32>
    %c59 = arith.constant 59 : index
    %278 = memref.load %arg1[%c59] : memref<98xf32, #tpu.memory_space<smem>>
    %279 = vector.extract_strided_slice %51 {offsets = [0, 96], sizes = [1, 256], strides = [1, 1]} : vector<1x435xf32> to vector<1x256xf32>
    %280 = vector.broadcast %278 : f32 to vector<1x256xf32>
    %281 = arith.mulf %280, %279 : vector<1x256xf32>
    %282 = arith.addf %277, %281 : vector<1x256xf32>
    %283 = arith.addf %273, %282 : vector<1x256xf32>
    %c17 = arith.constant 17 : index
    %284 = memref.load %arg1[%c17] : memref<98xf32, #tpu.memory_space<smem>>
    %285 = vector.extract_strided_slice %48 {offsets = [0, 112], sizes = [1, 256], strides = [1, 1]} : vector<1x435xf32> to vector<1x256xf32>
    %286 = vector.broadcast %284 : f32 to vector<1x256xf32>
    %287 = arith.mulf %286, %285 : vector<1x256xf32>
    %c66 = arith.constant 66 : index
    %288 = memref.load %arg1[%c66] : memref<98xf32, #tpu.memory_space<smem>>
    %289 = vector.extract_strided_slice %51 {offsets = [0, 112], sizes = [1, 256], strides = [1, 1]} : vector<1x435xf32> to vector<1x256xf32>
    %290 = vector.broadcast %288 : f32 to vector<1x256xf32>
    %291 = arith.mulf %290, %289 : vector<1x256xf32>
    %292 = arith.addf %287, %291 : vector<1x256xf32>
    %293 = arith.addf %283, %292 : vector<1x256xf32>
    %c24 = arith.constant 24 : index
    %294 = memref.load %arg1[%c24] : memref<98xf32, #tpu.memory_space<smem>>
    %295 = vector.extract_strided_slice %48 {offsets = [0, 128], sizes = [1, 256], strides = [1, 1]} : vector<1x435xf32> to vector<1x256xf32>
    %296 = vector.broadcast %294 : f32 to vector<1x256xf32>
    %297 = arith.mulf %296, %295 : vector<1x256xf32>
    %c73 = arith.constant 73 : index
    %298 = memref.load %arg1[%c73] : memref<98xf32, #tpu.memory_space<smem>>
    %299 = vector.extract_strided_slice %51 {offsets = [0, 128], sizes = [1, 256], strides = [1, 1]} : vector<1x435xf32> to vector<1x256xf32>
    %300 = vector.broadcast %298 : f32 to vector<1x256xf32>
    %301 = arith.mulf %300, %299 : vector<1x256xf32>
    %302 = arith.addf %297, %301 : vector<1x256xf32>
    %303 = arith.addf %293, %302 : vector<1x256xf32>
    %c31 = arith.constant 31 : index
    %304 = memref.load %arg1[%c31] : memref<98xf32, #tpu.memory_space<smem>>
    %305 = vector.extract_strided_slice %48 {offsets = [0, 144], sizes = [1, 256], strides = [1, 1]} : vector<1x435xf32> to vector<1x256xf32>
    %306 = vector.broadcast %304 : f32 to vector<1x256xf32>
    %307 = arith.mulf %306, %305 : vector<1x256xf32>
    %c80 = arith.constant 80 : index
    %308 = memref.load %arg1[%c80] : memref<98xf32, #tpu.memory_space<smem>>
    %309 = vector.extract_strided_slice %51 {offsets = [0, 144], sizes = [1, 256], strides = [1, 1]} : vector<1x435xf32> to vector<1x256xf32>
    %310 = vector.broadcast %308 : f32 to vector<1x256xf32>
    %311 = arith.mulf %310, %309 : vector<1x256xf32>
    %312 = arith.addf %307, %311 : vector<1x256xf32>
    %313 = arith.addf %303, %312 : vector<1x256xf32>
    %c38 = arith.constant 38 : index
    %314 = memref.load %arg1[%c38] : memref<98xf32, #tpu.memory_space<smem>>
    %315 = vector.extract_strided_slice %48 {offsets = [0, 160], sizes = [1, 256], strides = [1, 1]} : vector<1x435xf32> to vector<1x256xf32>
    %316 = vector.broadcast %314 : f32 to vector<1x256xf32>
    %317 = arith.mulf %316, %315 : vector<1x256xf32>
    %c87 = arith.constant 87 : index
    %318 = memref.load %arg1[%c87] : memref<98xf32, #tpu.memory_space<smem>>
    %319 = vector.extract_strided_slice %51 {offsets = [0, 160], sizes = [1, 256], strides = [1, 1]} : vector<1x435xf32> to vector<1x256xf32>
    %320 = vector.broadcast %318 : f32 to vector<1x256xf32>
    %321 = arith.mulf %320, %319 : vector<1x256xf32>
    %322 = arith.addf %317, %321 : vector<1x256xf32>
    %323 = arith.addf %313, %322 : vector<1x256xf32>
    %c45 = arith.constant 45 : index
    %324 = memref.load %arg1[%c45] : memref<98xf32, #tpu.memory_space<smem>>
    %325 = vector.extract_strided_slice %48 {offsets = [0, 176], sizes = [1, 256], strides = [1, 1]} : vector<1x435xf32> to vector<1x256xf32>
    %326 = vector.broadcast %324 : f32 to vector<1x256xf32>
    %327 = arith.mulf %326, %325 : vector<1x256xf32>
    %c94 = arith.constant 94 : index
    %328 = memref.load %arg1[%c94] : memref<98xf32, #tpu.memory_space<smem>>
    %329 = vector.extract_strided_slice %51 {offsets = [0, 176], sizes = [1, 256], strides = [1, 1]} : vector<1x435xf32> to vector<1x256xf32>
    %330 = vector.broadcast %328 : f32 to vector<1x256xf32>
    %331 = arith.mulf %330, %329 : vector<1x256xf32>
    %332 = arith.addf %327, %331 : vector<1x256xf32>
    %333 = arith.addf %323, %332 : vector<1x256xf32>
    %334 = arith.mulf %333, %7 : vector<1x256xf32>
    %c4_39 = arith.constant 4 : index
    %335 = memref.load %arg1[%c4_39] : memref<98xf32, #tpu.memory_space<smem>>
    %336 = vector.extract_strided_slice %48 {offsets = [0, 81], sizes = [1, 256], strides = [1, 1]} : vector<1x435xf32> to vector<1x256xf32>
    %337 = vector.broadcast %335 : f32 to vector<1x256xf32>
    %338 = arith.mulf %337, %336 : vector<1x256xf32>
    %c53 = arith.constant 53 : index
    %339 = memref.load %arg1[%c53] : memref<98xf32, #tpu.memory_space<smem>>
    %340 = vector.extract_strided_slice %51 {offsets = [0, 81], sizes = [1, 256], strides = [1, 1]} : vector<1x435xf32> to vector<1x256xf32>
    %341 = vector.broadcast %339 : f32 to vector<1x256xf32>
    %342 = arith.mulf %341, %340 : vector<1x256xf32>
    %343 = arith.addf %338, %342 : vector<1x256xf32>
    %c11 = arith.constant 11 : index
    %344 = memref.load %arg1[%c11] : memref<98xf32, #tpu.memory_space<smem>>
    %345 = vector.extract_strided_slice %48 {offsets = [0, 97], sizes = [1, 256], strides = [1, 1]} : vector<1x435xf32> to vector<1x256xf32>
    %346 = vector.broadcast %344 : f32 to vector<1x256xf32>
    %347 = arith.mulf %346, %345 : vector<1x256xf32>
    %c60 = arith.constant 60 : index
    %348 = memref.load %arg1[%c60] : memref<98xf32, #tpu.memory_space<smem>>
    %349 = vector.extract_strided_slice %51 {offsets = [0, 97], sizes = [1, 256], strides = [1, 1]} : vector<1x435xf32> to vector<1x256xf32>
    %350 = vector.broadcast %348 : f32 to vector<1x256xf32>
    %351 = arith.mulf %350, %349 : vector<1x256xf32>
    %352 = arith.addf %347, %351 : vector<1x256xf32>
    %353 = arith.addf %343, %352 : vector<1x256xf32>
    %c18 = arith.constant 18 : index
    %354 = memref.load %arg1[%c18] : memref<98xf32, #tpu.memory_space<smem>>
    %355 = vector.extract_strided_slice %48 {offsets = [0, 113], sizes = [1, 256], strides = [1, 1]} : vector<1x435xf32> to vector<1x256xf32>
    %356 = vector.broadcast %354 : f32 to vector<1x256xf32>
    %357 = arith.mulf %356, %355 : vector<1x256xf32>
    %c67 = arith.constant 67 : index
    %358 = memref.load %arg1[%c67] : memref<98xf32, #tpu.memory_space<smem>>
    %359 = vector.extract_strided_slice %51 {offsets = [0, 113], sizes = [1, 256], strides = [1, 1]} : vector<1x435xf32> to vector<1x256xf32>
    %360 = vector.broadcast %358 : f32 to vector<1x256xf32>
    %361 = arith.mulf %360, %359 : vector<1x256xf32>
    %362 = arith.addf %357, %361 : vector<1x256xf32>
    %363 = arith.addf %353, %362 : vector<1x256xf32>
    %c25 = arith.constant 25 : index
    %364 = memref.load %arg1[%c25] : memref<98xf32, #tpu.memory_space<smem>>
    %365 = vector.extract_strided_slice %48 {offsets = [0, 129], sizes = [1, 256], strides = [1, 1]} : vector<1x435xf32> to vector<1x256xf32>
    %366 = vector.broadcast %364 : f32 to vector<1x256xf32>
    %367 = arith.mulf %366, %365 : vector<1x256xf32>
    %c74 = arith.constant 74 : index
    %368 = memref.load %arg1[%c74] : memref<98xf32, #tpu.memory_space<smem>>
    %369 = vector.extract_strided_slice %51 {offsets = [0, 129], sizes = [1, 256], strides = [1, 1]} : vector<1x435xf32> to vector<1x256xf32>
    %370 = vector.broadcast %368 : f32 to vector<1x256xf32>
    %371 = arith.mulf %370, %369 : vector<1x256xf32>
    %372 = arith.addf %367, %371 : vector<1x256xf32>
    %373 = arith.addf %363, %372 : vector<1x256xf32>
    %c32 = arith.constant 32 : index
    %374 = memref.load %arg1[%c32] : memref<98xf32, #tpu.memory_space<smem>>
    %375 = vector.extract_strided_slice %48 {offsets = [0, 145], sizes = [1, 256], strides = [1, 1]} : vector<1x435xf32> to vector<1x256xf32>
    %376 = vector.broadcast %374 : f32 to vector<1x256xf32>
    %377 = arith.mulf %376, %375 : vector<1x256xf32>
    %c81 = arith.constant 81 : index
    %378 = memref.load %arg1[%c81] : memref<98xf32, #tpu.memory_space<smem>>
    %379 = vector.extract_strided_slice %51 {offsets = [0, 145], sizes = [1, 256], strides = [1, 1]} : vector<1x435xf32> to vector<1x256xf32>
    %380 = vector.broadcast %378 : f32 to vector<1x256xf32>
    %381 = arith.mulf %380, %379 : vector<1x256xf32>
    %382 = arith.addf %377, %381 : vector<1x256xf32>
    %383 = arith.addf %373, %382 : vector<1x256xf32>
    %c39 = arith.constant 39 : index
    %384 = memref.load %arg1[%c39] : memref<98xf32, #tpu.memory_space<smem>>
    %385 = vector.extract_strided_slice %48 {offsets = [0, 161], sizes = [1, 256], strides = [1, 1]} : vector<1x435xf32> to vector<1x256xf32>
    %386 = vector.broadcast %384 : f32 to vector<1x256xf32>
    %387 = arith.mulf %386, %385 : vector<1x256xf32>
    %c88 = arith.constant 88 : index
    %388 = memref.load %arg1[%c88] : memref<98xf32, #tpu.memory_space<smem>>
    %389 = vector.extract_strided_slice %51 {offsets = [0, 161], sizes = [1, 256], strides = [1, 1]} : vector<1x435xf32> to vector<1x256xf32>
    %390 = vector.broadcast %388 : f32 to vector<1x256xf32>
    %391 = arith.mulf %390, %389 : vector<1x256xf32>
    %392 = arith.addf %387, %391 : vector<1x256xf32>
    %393 = arith.addf %383, %392 : vector<1x256xf32>
    %c46 = arith.constant 46 : index
    %394 = memref.load %arg1[%c46] : memref<98xf32, #tpu.memory_space<smem>>
    %395 = vector.extract_strided_slice %48 {offsets = [0, 177], sizes = [1, 256], strides = [1, 1]} : vector<1x435xf32> to vector<1x256xf32>
    %396 = vector.broadcast %394 : f32 to vector<1x256xf32>
    %397 = arith.mulf %396, %395 : vector<1x256xf32>
    %c95 = arith.constant 95 : index
    %398 = memref.load %arg1[%c95] : memref<98xf32, #tpu.memory_space<smem>>
    %399 = vector.extract_strided_slice %51 {offsets = [0, 177], sizes = [1, 256], strides = [1, 1]} : vector<1x435xf32> to vector<1x256xf32>
    %400 = vector.broadcast %398 : f32 to vector<1x256xf32>
    %401 = arith.mulf %400, %399 : vector<1x256xf32>
    %402 = arith.addf %397, %401 : vector<1x256xf32>
    %403 = arith.addf %393, %402 : vector<1x256xf32>
    %404 = arith.mulf %403, %8 : vector<1x256xf32>
    %c5_40 = arith.constant 5 : index
    %405 = memref.load %arg1[%c5_40] : memref<98xf32, #tpu.memory_space<smem>>
    %406 = vector.extract_strided_slice %48 {offsets = [0, 82], sizes = [1, 256], strides = [1, 1]} : vector<1x435xf32> to vector<1x256xf32>
    %407 = vector.broadcast %405 : f32 to vector<1x256xf32>
    %408 = arith.mulf %407, %406 : vector<1x256xf32>
    %c54 = arith.constant 54 : index
    %409 = memref.load %arg1[%c54] : memref<98xf32, #tpu.memory_space<smem>>
    %410 = vector.extract_strided_slice %51 {offsets = [0, 82], sizes = [1, 256], strides = [1, 1]} : vector<1x435xf32> to vector<1x256xf32>
    %411 = vector.broadcast %409 : f32 to vector<1x256xf32>
    %412 = arith.mulf %411, %410 : vector<1x256xf32>
    %413 = arith.addf %408, %412 : vector<1x256xf32>
    %c12 = arith.constant 12 : index
    %414 = memref.load %arg1[%c12] : memref<98xf32, #tpu.memory_space<smem>>
    %415 = vector.extract_strided_slice %48 {offsets = [0, 98], sizes = [1, 256], strides = [1, 1]} : vector<1x435xf32> to vector<1x256xf32>
    %416 = vector.broadcast %414 : f32 to vector<1x256xf32>
    %417 = arith.mulf %416, %415 : vector<1x256xf32>
    %c61 = arith.constant 61 : index
    %418 = memref.load %arg1[%c61] : memref<98xf32, #tpu.memory_space<smem>>
    %419 = vector.extract_strided_slice %51 {offsets = [0, 98], sizes = [1, 256], strides = [1, 1]} : vector<1x435xf32> to vector<1x256xf32>
    %420 = vector.broadcast %418 : f32 to vector<1x256xf32>
    %421 = arith.mulf %420, %419 : vector<1x256xf32>
    %422 = arith.addf %417, %421 : vector<1x256xf32>
    %423 = arith.addf %413, %422 : vector<1x256xf32>
    %c19 = arith.constant 19 : index
    %424 = memref.load %arg1[%c19] : memref<98xf32, #tpu.memory_space<smem>>
    %425 = vector.extract_strided_slice %48 {offsets = [0, 114], sizes = [1, 256], strides = [1, 1]} : vector<1x435xf32> to vector<1x256xf32>
    %426 = vector.broadcast %424 : f32 to vector<1x256xf32>
    %427 = arith.mulf %426, %425 : vector<1x256xf32>
    %c68 = arith.constant 68 : index
    %428 = memref.load %arg1[%c68] : memref<98xf32, #tpu.memory_space<smem>>
    %429 = vector.extract_strided_slice %51 {offsets = [0, 114], sizes = [1, 256], strides = [1, 1]} : vector<1x435xf32> to vector<1x256xf32>
    %430 = vector.broadcast %428 : f32 to vector<1x256xf32>
    %431 = arith.mulf %430, %429 : vector<1x256xf32>
    %432 = arith.addf %427, %431 : vector<1x256xf32>
    %433 = arith.addf %423, %432 : vector<1x256xf32>
    %c26 = arith.constant 26 : index
    %434 = memref.load %arg1[%c26] : memref<98xf32, #tpu.memory_space<smem>>
    %435 = vector.extract_strided_slice %48 {offsets = [0, 130], sizes = [1, 256], strides = [1, 1]} : vector<1x435xf32> to vector<1x256xf32>
    %436 = vector.broadcast %434 : f32 to vector<1x256xf32>
    %437 = arith.mulf %436, %435 : vector<1x256xf32>
    %c75 = arith.constant 75 : index
    %438 = memref.load %arg1[%c75] : memref<98xf32, #tpu.memory_space<smem>>
    %439 = vector.extract_strided_slice %51 {offsets = [0, 130], sizes = [1, 256], strides = [1, 1]} : vector<1x435xf32> to vector<1x256xf32>
    %440 = vector.broadcast %438 : f32 to vector<1x256xf32>
    %441 = arith.mulf %440, %439 : vector<1x256xf32>
    %442 = arith.addf %437, %441 : vector<1x256xf32>
    %443 = arith.addf %433, %442 : vector<1x256xf32>
    %c33 = arith.constant 33 : index
    %444 = memref.load %arg1[%c33] : memref<98xf32, #tpu.memory_space<smem>>
    %445 = vector.extract_strided_slice %48 {offsets = [0, 146], sizes = [1, 256], strides = [1, 1]} : vector<1x435xf32> to vector<1x256xf32>
    %446 = vector.broadcast %444 : f32 to vector<1x256xf32>
    %447 = arith.mulf %446, %445 : vector<1x256xf32>
    %c82 = arith.constant 82 : index
    %448 = memref.load %arg1[%c82] : memref<98xf32, #tpu.memory_space<smem>>
    %449 = vector.extract_strided_slice %51 {offsets = [0, 146], sizes = [1, 256], strides = [1, 1]} : vector<1x435xf32> to vector<1x256xf32>
    %450 = vector.broadcast %448 : f32 to vector<1x256xf32>
    %451 = arith.mulf %450, %449 : vector<1x256xf32>
    %452 = arith.addf %447, %451 : vector<1x256xf32>
    %453 = arith.addf %443, %452 : vector<1x256xf32>
    %c40 = arith.constant 40 : index
    %454 = memref.load %arg1[%c40] : memref<98xf32, #tpu.memory_space<smem>>
    %455 = vector.extract_strided_slice %48 {offsets = [0, 162], sizes = [1, 256], strides = [1, 1]} : vector<1x435xf32> to vector<1x256xf32>
    %456 = vector.broadcast %454 : f32 to vector<1x256xf32>
    %457 = arith.mulf %456, %455 : vector<1x256xf32>
    %c89 = arith.constant 89 : index
    %458 = memref.load %arg1[%c89] : memref<98xf32, #tpu.memory_space<smem>>
    %459 = vector.extract_strided_slice %51 {offsets = [0, 162], sizes = [1, 256], strides = [1, 1]} : vector<1x435xf32> to vector<1x256xf32>
    %460 = vector.broadcast %458 : f32 to vector<1x256xf32>
    %461 = arith.mulf %460, %459 : vector<1x256xf32>
    %462 = arith.addf %457, %461 : vector<1x256xf32>
    %463 = arith.addf %453, %462 : vector<1x256xf32>
    %c47 = arith.constant 47 : index
    %464 = memref.load %arg1[%c47] : memref<98xf32, #tpu.memory_space<smem>>
    %465 = vector.extract_strided_slice %48 {offsets = [0, 178], sizes = [1, 256], strides = [1, 1]} : vector<1x435xf32> to vector<1x256xf32>
    %466 = vector.broadcast %464 : f32 to vector<1x256xf32>
    %467 = arith.mulf %466, %465 : vector<1x256xf32>
    %c96 = arith.constant 96 : index
    %468 = memref.load %arg1[%c96] : memref<98xf32, #tpu.memory_space<smem>>
    %469 = vector.extract_strided_slice %51 {offsets = [0, 178], sizes = [1, 256], strides = [1, 1]} : vector<1x435xf32> to vector<1x256xf32>
    %470 = vector.broadcast %468 : f32 to vector<1x256xf32>
    %471 = arith.mulf %470, %469 : vector<1x256xf32>
    %472 = arith.addf %467, %471 : vector<1x256xf32>
    %473 = arith.addf %463, %472 : vector<1x256xf32>
    %474 = arith.mulf %473, %9 : vector<1x256xf32>
    %c6_41 = arith.constant 6 : index
    %475 = memref.load %arg1[%c6_41] : memref<98xf32, #tpu.memory_space<smem>>
    %476 = vector.extract_strided_slice %48 {offsets = [0, 83], sizes = [1, 256], strides = [1, 1]} : vector<1x435xf32> to vector<1x256xf32>
    %477 = vector.broadcast %475 : f32 to vector<1x256xf32>
    %478 = arith.mulf %477, %476 : vector<1x256xf32>
    %c55 = arith.constant 55 : index
    %479 = memref.load %arg1[%c55] : memref<98xf32, #tpu.memory_space<smem>>
    %480 = vector.extract_strided_slice %51 {offsets = [0, 83], sizes = [1, 256], strides = [1, 1]} : vector<1x435xf32> to vector<1x256xf32>
    %481 = vector.broadcast %479 : f32 to vector<1x256xf32>
    %482 = arith.mulf %481, %480 : vector<1x256xf32>
    %483 = arith.addf %478, %482 : vector<1x256xf32>
    %c13 = arith.constant 13 : index
    %484 = memref.load %arg1[%c13] : memref<98xf32, #tpu.memory_space<smem>>
    %485 = vector.extract_strided_slice %48 {offsets = [0, 99], sizes = [1, 256], strides = [1, 1]} : vector<1x435xf32> to vector<1x256xf32>
    %486 = vector.broadcast %484 : f32 to vector<1x256xf32>
    %487 = arith.mulf %486, %485 : vector<1x256xf32>
    %c62 = arith.constant 62 : index
    %488 = memref.load %arg1[%c62] : memref<98xf32, #tpu.memory_space<smem>>
    %489 = vector.extract_strided_slice %51 {offsets = [0, 99], sizes = [1, 256], strides = [1, 1]} : vector<1x435xf32> to vector<1x256xf32>
    %490 = vector.broadcast %488 : f32 to vector<1x256xf32>
    %491 = arith.mulf %490, %489 : vector<1x256xf32>
    %492 = arith.addf %487, %491 : vector<1x256xf32>
    %493 = arith.addf %483, %492 : vector<1x256xf32>
    %c20 = arith.constant 20 : index
    %494 = memref.load %arg1[%c20] : memref<98xf32, #tpu.memory_space<smem>>
    %495 = vector.extract_strided_slice %48 {offsets = [0, 115], sizes = [1, 256], strides = [1, 1]} : vector<1x435xf32> to vector<1x256xf32>
    %496 = vector.broadcast %494 : f32 to vector<1x256xf32>
    %497 = arith.mulf %496, %495 : vector<1x256xf32>
    %c69 = arith.constant 69 : index
    %498 = memref.load %arg1[%c69] : memref<98xf32, #tpu.memory_space<smem>>
    %499 = vector.extract_strided_slice %51 {offsets = [0, 115], sizes = [1, 256], strides = [1, 1]} : vector<1x435xf32> to vector<1x256xf32>
    %500 = vector.broadcast %498 : f32 to vector<1x256xf32>
    %501 = arith.mulf %500, %499 : vector<1x256xf32>
    %502 = arith.addf %497, %501 : vector<1x256xf32>
    %503 = arith.addf %493, %502 : vector<1x256xf32>
    %c27 = arith.constant 27 : index
    %504 = memref.load %arg1[%c27] : memref<98xf32, #tpu.memory_space<smem>>
    %505 = vector.extract_strided_slice %48 {offsets = [0, 131], sizes = [1, 256], strides = [1, 1]} : vector<1x435xf32> to vector<1x256xf32>
    %506 = vector.broadcast %504 : f32 to vector<1x256xf32>
    %507 = arith.mulf %506, %505 : vector<1x256xf32>
    %c76 = arith.constant 76 : index
    %508 = memref.load %arg1[%c76] : memref<98xf32, #tpu.memory_space<smem>>
    %509 = vector.extract_strided_slice %51 {offsets = [0, 131], sizes = [1, 256], strides = [1, 1]} : vector<1x435xf32> to vector<1x256xf32>
    %510 = vector.broadcast %508 : f32 to vector<1x256xf32>
    %511 = arith.mulf %510, %509 : vector<1x256xf32>
    %512 = arith.addf %507, %511 : vector<1x256xf32>
    %513 = arith.addf %503, %512 : vector<1x256xf32>
    %c34 = arith.constant 34 : index
    %514 = memref.load %arg1[%c34] : memref<98xf32, #tpu.memory_space<smem>>
    %515 = vector.extract_strided_slice %48 {offsets = [0, 147], sizes = [1, 256], strides = [1, 1]} : vector<1x435xf32> to vector<1x256xf32>
    %516 = vector.broadcast %514 : f32 to vector<1x256xf32>
    %517 = arith.mulf %516, %515 : vector<1x256xf32>
    %c83 = arith.constant 83 : index
    %518 = memref.load %arg1[%c83] : memref<98xf32, #tpu.memory_space<smem>>
    %519 = vector.extract_strided_slice %51 {offsets = [0, 147], sizes = [1, 256], strides = [1, 1]} : vector<1x435xf32> to vector<1x256xf32>
    %520 = vector.broadcast %518 : f32 to vector<1x256xf32>
    %521 = arith.mulf %520, %519 : vector<1x256xf32>
    %522 = arith.addf %517, %521 : vector<1x256xf32>
    %523 = arith.addf %513, %522 : vector<1x256xf32>
    %c41 = arith.constant 41 : index
    %524 = memref.load %arg1[%c41] : memref<98xf32, #tpu.memory_space<smem>>
    %525 = vector.extract_strided_slice %48 {offsets = [0, 163], sizes = [1, 256], strides = [1, 1]} : vector<1x435xf32> to vector<1x256xf32>
    %526 = vector.broadcast %524 : f32 to vector<1x256xf32>
    %527 = arith.mulf %526, %525 : vector<1x256xf32>
    %c90 = arith.constant 90 : index
    %528 = memref.load %arg1[%c90] : memref<98xf32, #tpu.memory_space<smem>>
    %529 = vector.extract_strided_slice %51 {offsets = [0, 163], sizes = [1, 256], strides = [1, 1]} : vector<1x435xf32> to vector<1x256xf32>
    %530 = vector.broadcast %528 : f32 to vector<1x256xf32>
    %531 = arith.mulf %530, %529 : vector<1x256xf32>
    %532 = arith.addf %527, %531 : vector<1x256xf32>
    %533 = arith.addf %523, %532 : vector<1x256xf32>
    %c48 = arith.constant 48 : index
    %534 = memref.load %arg1[%c48] : memref<98xf32, #tpu.memory_space<smem>>
    %535 = vector.extract_strided_slice %48 {offsets = [0, 179], sizes = [1, 256], strides = [1, 1]} : vector<1x435xf32> to vector<1x256xf32>
    %536 = vector.broadcast %534 : f32 to vector<1x256xf32>
    %537 = arith.mulf %536, %535 : vector<1x256xf32>
    %c97 = arith.constant 97 : index
    %538 = memref.load %arg1[%c97] : memref<98xf32, #tpu.memory_space<smem>>
    %539 = vector.extract_strided_slice %51 {offsets = [0, 179], sizes = [1, 256], strides = [1, 1]} : vector<1x435xf32> to vector<1x256xf32>
    %540 = vector.broadcast %538 : f32 to vector<1x256xf32>
    %541 = arith.mulf %540, %539 : vector<1x256xf32>
    %542 = arith.addf %537, %541 : vector<1x256xf32>
    %543 = arith.addf %533, %542 : vector<1x256xf32>
    %544 = arith.mulf %543, %10 : vector<1x256xf32>
    %545 = arith.addf %54, %124 : vector<1x256xf32>
    %546 = arith.addf %194, %264 : vector<1x256xf32>
    %547 = arith.addf %334, %404 : vector<1x256xf32>
    %548 = arith.addf %474, %544 : vector<1x256xf32>
    %549 = arith.addf %545, %546 : vector<1x256xf32>
    %550 = arith.addf %547, %548 : vector<1x256xf32>
    %551 = arith.addf %549, %550 : vector<1x256xf32>
    %552 = vector.shape_cast %551 : vector<1x256xf32> to vector<1x1x256xf32>
    %cst_42 = arith.constant dense<0.000000e+00> : vector<1xf32>
    %553 = vector.multi_reduction <add>, %552, %cst_42 [1, 2] : vector<1x1x256xf32> to vector<1xf32>
    %554 = vector.shape_cast %553 : vector<1xf32> to vector<1x1x1xf32>
    %555 = vector.extract %554[0, 0, 0] : f32 from vector<1x1x1xf32>
    %556 = vector.broadcast %555 : f32 to vector<1x1xf32>
    %cst_43 = arith.constant 2.560000e+02 : f32
    %557 = vector.broadcast %cst_43 : f32 to vector<1x1xf32>
    %558 = arith.divf %556, %557 : vector<1x1xf32>
    %559 = vector.broadcast %558 : vector<1x1xf32> to vector<1x256xf32>
    %560 = arith.subf %551, %559 : vector<1x256xf32>
    %561 = arith.mulf %560, %560 : vector<1x256xf32>
    %562 = vector.shape_cast %561 : vector<1x256xf32> to vector<1x1x256xf32>
    %cst_44 = arith.constant dense<0.000000e+00> : vector<1xf32>
    %563 = vector.multi_reduction <add>, %562, %cst_44 [1, 2] : vector<1x1x256xf32> to vector<1xf32>
    %564 = vector.shape_cast %563 : vector<1xf32> to vector<1x1x1xf32>
    %565 = vector.extract %564[0, 0, 0] : f32 from vector<1x1x1xf32>
    %566 = vector.broadcast %565 : f32 to vector<1x1xf32>
    %cst_45 = arith.constant 2.560000e+02 : f32
    %567 = vector.broadcast %cst_45 : f32 to vector<1x1xf32>
    %568 = arith.divf %566, %567 : vector<1x1xf32>
    %cst_46 = arith.constant 9.99999974E-6 : f32
    %569 = vector.broadcast %cst_46 : f32 to vector<1x1xf32>
    %570 = arith.addf %568, %569 : vector<1x1xf32>
    %571 = math.rsqrt %570 : vector<1x1xf32>
    %572 = vector.broadcast %571 : vector<1x1xf32> to vector<1x256xf32>
    %573 = arith.mulf %560, %572 : vector<1x256xf32>
    %574 = vector.broadcast %12 : f32 to vector<1x256xf32>
    %575 = arith.mulf %574, %573 : vector<1x256xf32>
    %576 = vector.broadcast %13 : f32 to vector<1x256xf32>
    %577 = arith.addf %575, %576 : vector<1x256xf32>
    %578 = arith.negf %577 : vector<1x256xf32>
    %579 = math.exp %578 : vector<1x256xf32>
    %cst_47 = arith.constant 1.000000e+00 : f32
    %580 = vector.broadcast %cst_47 : f32 to vector<1x256xf32>
    %581 = arith.addf %580, %579 : vector<1x256xf32>
    %582 = arith.divf %580, %581 : vector<1x256xf32>
    %583 = arith.index_cast %c0_i32 : i32 to index
    %c0_48 = arith.constant 0 : index
    %c0_49 = arith.constant 0 : index
    %584 = vector.load %arg4[%583, %c0_48, %c0_49] : memref<1x4x256xf32, #tpu.memory_space<vmem>>, vector<1x4x256xf32>
    %585 = vector.shape_cast %584 : vector<1x4x256xf32> to vector<4x256xf32>
    %586 = vector.broadcast %582 : vector<1x256xf32> to vector<4x256xf32>
    %587 = arith.mulf %585, %586 : vector<4x256xf32>
    %588 = arith.index_cast %c0_i32 : i32 to index
    %c0_50 = arith.constant 0 : index
    %c0_51 = arith.constant 0 : index
    %589 = vector.load %arg5[%588, %c0_50, %c0_51] : memref<1x4x256xf32, #tpu.memory_space<vmem>>, vector<1x4x256xf32>
    %590 = vector.shape_cast %589 : vector<1x4x256xf32> to vector<4x256xf32>
    %591 = vector.shape_cast %587 : vector<4x256xf32> to vector<1x4x256xf32>
    tpu.vector_store %arg5[%588, %c0_50, %c0_51], %591 {strides = array<i32>} : memref<1x4x256xf32, #tpu.memory_space<vmem>>, vector<1x4x256xf32>,
    %c1_i32_52 = arith.constant 1 : i32
    return
  }
  func.func @transform_0(%arg0: i32, %arg1: memref<98xf32, #tpu.memory_space<smem>>, %arg2: memref<3xf32, #tpu.memory_space<smem>>) -> (i32, i32) {
    %c0_i32 = arith.constant 0 : i32
    %c0_i32_0 = arith.constant 0 : i32
    %c0_i32_1 = arith.constant 0 : i32
    return %c0_i32, %c0_i32_0 : i32, i32
  }
  func.func @transform_1(%arg0: i32, %arg1: memref<98xf32, #tpu.memory_space<smem>>, %arg2: memref<3xf32, #tpu.memory_space<smem>>) -> (i32, i32, i32) {
    %c0_i32 = arith.constant 0 : i32
    %c0_i32_0 = arith.constant 0 : i32
    %c0_i32_1 = arith.constant 0 : i32
    return %arg0, %c0_i32, %c0_i32_0 : i32, i32, i32
  }
  func.func @transform_2(%arg0: i32, %arg1: memref<98xf32, #tpu.memory_space<smem>>, %arg2: memref<3xf32, #tpu.memory_space<smem>>) -> (i32, i32, i32) {
    %c0_i32 = arith.constant 0 : i32
    %c0_i32_0 = arith.constant 0 : i32
    %c0_i32_1 = arith.constant 0 : i32
    return %arg0, %c0_i32, %c0_i32_0 : i32, i32, i32
  }
}

</mosaic_0001>

<llo_original>
// kernel: tpu_custom_call.1
$region0: #{tpu_custom_call.1}
  #allocation0 [shape = 'u32[]', space=smem, size = 0x4, offset = 0x4, fixed_abs, tag = 'smem constant byte address 0x4 - core index']
  #allocation1 [shape = 'u32[144,128]{1,0:T(1,128)}', space=vmem, size = 0x12000, scoped, tag = 'internal scratch']
  #allocation2 [shape = 'f32[2,2,435]{2,1,0:T(2,128)}', space=vmem, size = 0x2000, scoped, tag = 'scratch operand']
  #allocation3 [shape = 's32[1]{0}', space=sflag, size = 0x4, scoped, tag = 'scoped memory for tpu_custom_call.1']
  #allocation4 [shape = 'u8[512]{0}', space=smem, size = 0x200, scoped, tag = 'prefetched SMEM operand 0']
  #allocation5 [shape = 'u8[512]{0}', space=smem, size = 0x200, scoped, tag = 'prefetched SMEM operand 1']
  %s0 = inlined_call_operand.hbm [shape: f32[98], index: 0, kind: input, shape index: {}]
  %s1 = inlined_call_operand.vmem [shape: f32[3], index: 1, kind: input, shape index: {}]
  %s2 = inlined_call_operand.hbm [shape: f32[7,256], index: 2, kind: input, shape index: {}]
  %s3 = inlined_call_operand.hbm [shape: f32[2,4,256], index: 3, kind: input, shape index: {}]
  %s4 = inlined_call_operand.hbm [shape: f32[2,4,256], index: 4, kind: output, shape index: {}]
  %s5 = sld [smem:[#allocation0]]
  $region49: #{tpu_custom_call.1} parent=0
    _
  %s7 = ssub.s32 1, %s5
  %s8 = scalar_select 0, %s7, %s5
  %10 = dma.hbm_to_smem %s0, 16, [#allocation4], [#allocation3]
  %s11 = sshll.u32 %s1, 4
  %s12 = int_to_ptr.vmem [resolvable:$true] %s11
  %14 = dma.vmem_to_smem %s12, 16, [#allocation5], [#allocation3]
  %15 = dma.done [#allocation3], 32
  %16 = sfence
  $region1: #{tpu_custom_call.1} parent=0
    #allocation6 [shape = 'u8[8192]{0}', space=vmem, size = 0x2000, scoped, tag = 'input window, operand 2, single buffered']
    #allocation7 [shape = 's32[2]{0}', space=sflag, size = 0x8, scoped, tag = 'scoped memory for tpu_custom_call.1']
    #allocation8 [shape = 's32[2]{0}', space=sflag, size = 0x8, scoped, tag = 'scoped memory for tpu_custom_call.1']
    #allocation9 [shape = 'u8[8192]{0}', space=vmem, size = 0x2000, scoped, tag = 'input window, operand 3']
    #allocation10 [shape = 's32[2]{0}', space=sflag, size = 0x8, scoped, tag = 'scoped memory for tpu_custom_call.1']
    #allocation11 [shape = 'u8[8192]{0}', space=vmem, size = 0x2000, scoped, tag = 'output window, operand 0']
    %17 = vsyncpa [#allocation7], 0
    %18 = vsyncpa [#allocation10], 0
    %s19 = scalar_lea.sflag [#allocation10], 1
    %20 = vsyncpa %s19, 0
    %21 = vsyncpa [#allocation8], 0
    %s22 = scalar_lea.sflag [#allocation8], 1
    %23 = vsyncpa %s22, 0
    loop: start=0, step=1, limit=4
    $region2: #{tpu_custom_call.1} parent=1 // loop_pre_header
      _
    $region3: #{tpu_custom_call.1} parent=1 // loop_header
      %s25 = sphi 0, %s29
      %p26 = scmp.ge.s32.totalorder %s25, 4
      %s33 = sphi 0, %s33
      %s35 = sphi 0, %s33
      %s36 = sphi 0, %s35
      %s50 = sphi 0, %s36
      %s56 = sphi 0, %s58
      %s59 = sphi 0, %s56
      %s60 = sphi 0, %s59
      %s76 = sphi 0, %s60
      %s82 = sphi 0, %s84
      %s85 = sphi 0, %s82
      %s86 = sphi 0, %s85
      %s102 = sphi 0, %s86
    $region4: #{tpu_custom_call.1} parent=1 // loop_header_branch
      %28 = sbr.rel (%p26) target = $region8
    $region5: #{tpu_custom_call.1} parent=1 // loop_body
      %s30 = ssub.s32 %s25, 1
      %s31 = ssub.s32 %s25, 2
      %s32 = sadd.s32 %s25, 1
      %s34 = sadd.s32 %s33, 1
      %p37 = scmp.eq.s32.totalorder %s25, 1
      %p38 = scmp.ne.s32.totalorder %s33, %s35
      %p39 = scmp.eq.s32.totalorder %s25, 0
      %p40 = por %p38, %p39
      %p41 = scmp.ne.s32.totalorder %s33, %s35
      %p42 = scmp.eq.s32.totalorder %s30, 1
      %p43 = por %p41, %p42
      %p44 = scmp.ne.s32.totalorder %s35, %s36
      %p45 = scmp.eq.s32.totalorder %s30, 0
      %p46 = por %p44, %p45
      %p47 = scmp.ne.s32.totalorder %s35, %s36
      %p48 = scmp.eq.s32.totalorder %s31, 1
      %p49 = por %p47, %p48
      %p51 = scmp.ne.s32.totalorder %s36, %s50
      %p52 = scmp.eq.s32.totalorder %s31, 0
      %p53 = por %p51, %p52
      %s54 = ssub.s32 %s25, %s32
      %p55 = scmp.eq.s32.totalorder %s54, 0
      %s57 = sadd.s32 %s56, 1
      %s58 = scalar_select %p55, %s56, %s57
      %p61 = pneg %p55
      %p62 = scmp.eq.s32.totalorder %s25, 1
      %p63 = por %p61, %p62
      %p64 = scmp.ne.s32.totalorder %s56, %s59
      %p65 = scmp.eq.s32.totalorder %s25, 0
      %p66 = por %p64, %p65
      %p67 = scmp.ne.s32.totalorder %s56, %s59
      %p68 = scmp.eq.s32.totalorder %s30, 1
      %p69 = por %p67, %p68
      %p70 = scmp.ne.s32.totalorder %s59, %s60
      %p71 = scmp.eq.s32.totalorder %s30, 0
      %p72 = por %p70, %p71
      %p73 = scmp.ne.s32.totalorder %s59, %s60
      %p74 = scmp.eq.s32.totalorder %s31, 1
      %p75 = por %p73, %p74
      %p77 = scmp.ne.s32.totalorder %s60, %s76
      %p78 = scmp.eq.s32.totalorder %s31, 0
      %p79 = por %p77, %p78
      %s80 = ssub.s32 %s25, %s32
      %p81 = scmp.eq.s32.totalorder %s80, 0
      %s83 = sadd.s32 %s82, 1
      %s84 = scalar_select %p81, %s82, %s83
      %p87 = pneg %p81
      %p88 = scmp.eq.s32.totalorder %s25, 1
      %p89 = por %p87, %p88
      %p90 = scmp.ne.s32.totalorder %s82, %s85
      %p91 = scmp.eq.s32.totalorder %s25, 0
      %p92 = por %p90, %p91
      %p93 = scmp.ne.s32.totalorder %s82, %s85
      %p94 = scmp.eq.s32.totalorder %s30, 1
      %p95 = por %p93, %p94
      %p96 = scmp.ne.s32.totalorder %s85, %s86
      %p97 = scmp.eq.s32.totalorder %s30, 0
      %p98 = por %p96, %p97
      %p99 = scmp.ne.s32.totalorder %s85, %s86
      %p100 = scmp.eq.s32.totalorder %s31, 1
      %p101 = por %p99, %p100
      %p103 = scmp.ne.s32.totalorder %s86, %s102
      %p104 = scmp.eq.s32.totalorder %s31, 0
      %p105 = por %p103, %p104
      %p106 = scmp.le.s32.totalorder 1, %s25
      %p107 = scmp.lt.s32.totalorder %s25, 3
      %p108 = pnand %p106, %p107
      %p109 = pneg %p108
      // Predicated region
      $region9: #{tpu_custom_call.1} parent=5 // pred_check
        _
      $region10: #{tpu_custom_call.1} parent=5 // pred_check_branch
        %111 = sbr.rel (%p108) target = $region12
      $region11: #{tpu_custom_call.1} parent=5 // pred_region
        %s112 = ssub.s32 %s25, 1
        // Predicated region
        $region13: #{tpu_custom_call.1} parent=11 // pred_check
          %p113 = pneg %p46
        $region14: #{tpu_custom_call.1} parent=11 // pred_check_branch
          %115 = sbr.rel (%p113) target = $region16
        $region15: #{tpu_custom_call.1} parent=11 // pred_region
          %s117 = ssub.s32 256, 256
          %118 = vsyncadd [#allocation7], %s117
          %s120 = sshll.u32 [#allocation6], 4
          %s121 = int_to_ptr.vmem [resolvable:$true] %s120
          %123 = dma.hbm_to_vmem [thread:$0]  %s2, 256, %s121, [#allocation7]
        $region16: #{tpu_custom_call.1} parent=11 // pred_fallthru
          _
      $region12: #{tpu_custom_call.1} parent=5 // pred_fallthru
        _
      %p124 = scmp.lt.s32.totalorder %s25, 2
      // Predicated region
      $region17: #{tpu_custom_call.1} parent=5 // pred_check
        %p125 = pneg %p124
      $region18: #{tpu_custom_call.1} parent=5 // pred_check_branch
        %127 = sbr.rel (%p125) target = $region20
      $region19: #{tpu_custom_call.1} parent=5 // pred_region
        // Predicated region
        $region21: #{tpu_custom_call.1} parent=19 // pred_check
          %p128 = pneg %p66
        $region22: #{tpu_custom_call.1} parent=19 // pred_check_branch
          %130 = sbr.rel (%p128) target = $region24
        $region23: #{tpu_custom_call.1} parent=19 // pred_region
          %s131 = sand.u32 %s56, 1
          %s132 = scalar_lea.sflag [#allocation10], %s131
          %s133 = sand.u32 %s56, 1
          %s134 = smul.addr %s133, 8
          %s135 = scalar_lea.vmem [#allocation9], %s134
          %s137 = ssub.s32 128, 128
          %138 = vsyncadd %s132, %s137
          %s139 = smul.addr %s25, 2
          %s140 = smul.addr %s139, 64
          %s141 = scalar_lea.hbm %s3, %s140
          %s143 = sshll.u32 %s135, 4
          %s144 = int_to_ptr.vmem [resolvable:$true] %s143
          %146 = dma.hbm_to_vmem [thread:$0]  %s141, 128, %s144, %s132
        $region24: #{tpu_custom_call.1} parent=19 // pred_fallthru
          _
      $region20: #{tpu_custom_call.1} parent=5 // pred_fallthru
        _
      %p147 = scmp.le.s32.totalorder 1, %s25
      %p148 = scmp.lt.s32.totalorder %s25, 3
      %p149 = pnand %p147, %p148
      %p150 = pneg %p149
      // Predicated region
      $region25: #{tpu_custom_call.1} parent=5 // pred_check
        _
      $region26: #{tpu_custom_call.1} parent=5 // pred_check_branch
        %152 = sbr.rel (%p149) target = $region28
      $region27: #{tpu_custom_call.1} parent=5 // pred_region
        %s153 = ssub.s32 %s25, 1
        // Predicated region
        $region29: #{tpu_custom_call.1} parent=27 // pred_check
          %p154 = pneg %p46
        $region30: #{tpu_custom_call.1} parent=27 // pred_check_branch
          %156 = sbr.rel (%p154) target = $region32
        $region31: #{tpu_custom_call.1} parent=27 // pred_region
          %157 = dma.done [#allocation7], 256
        $region32: #{tpu_custom_call.1} parent=27 // pred_fallthru
          _
        %s158 = sand.u32 %s59, 1
        %s159 = scalar_lea.sflag [#allocation10], %s158
        %s160 = sand.u32 %s59, 1
        %s161 = smul.addr %s160, 8
        %s162 = scalar_lea.vmem [#allocation9], %s161
        // Predicated region
        $region33: #{tpu_custom_call.1} parent=27 // pred_check
          %p163 = pneg %p72
        $region34: #{tpu_custom_call.1} parent=27 // pred_check_branch
          %165 = sbr.rel (%p163) target = $region36
        $region35: #{tpu_custom_call.1} parent=27 // pred_region
          %166 = dma.done %s159, 128
        $region36: #{tpu_custom_call.1} parent=27 // pred_fallthru
          _
        %p167 = pneg %p46
        %p168 = pneg %p43
        %s169 = sand.u32 %s59, 1
        %s170 = scalar_lea.sflag [#allocation10], %s169
        %s171 = sand.u32 %s59, 1
        %s172 = smul.addr %s171, 8
        %s173 = scalar_lea.vmem [#allocation9], %s172
        %p174 = pneg %p72
        %p175 = pneg %p69
        %p176 = pneg %p98
        %p177 = pneg %p95
        %s178 = sand.u32 %s85, 1
        %s179 = scalar_lea.sflag [#allocation8], %s178
        %s180 = sand.u32 %s85, 1
        %s181 = smul.addr %s180, 8
        %s182 = scalar_lea.vmem [#allocation11], %s181
        %183 = vst [vmem:[#allocation2] sm:$0x3] 0.0
        %184 = vst [vmem:[#allocation2 + $0x8] sm:$0x3] 0.0
        %vm185 = vcmask 410624
        %186 = vst.msk [vmem:[#allocation2 + $0x6] sm:$0x3] %vm185, 0.0
        %187 = vst.msk [vmem:[#allocation2 + $0xe] sm:$0x3] %vm185, 0.0
        %v188 = vld [vmem:[#allocation6] ss:$8 sm:$0x3]
        %s189 = scalar_lea.vmem [#allocation6], 1
        %v190 = vld [vmem:[%s189] ss:$8 sm:$0x3]
        %s191 = scalar_lea.vmem [#allocation6], 2
        %v192 = vld [vmem:[%s191] ss:$8 sm:$0x3]
        %s193 = scalar_lea.vmem [#allocation6], 3
        %v194 = vld [vmem:[%s193] ss:$8 sm:$0x3]
        %s195 = scalar_lea.vmem [#allocation6], 4
        %v196 = vld [vmem:[%s195] ss:$8 sm:$0x3]
        %s197 = scalar_lea.vmem [#allocation6], 5
        %v198 = vld [vmem:[%s197] ss:$8 sm:$0x3]
        %s199 = scalar_lea.vmem [#allocation6], 6
        %v200 = vld [vmem:[%s199] ss:$8 sm:$0x3]
        %s201 = sld [smem:[#allocation5]]
        %s202 = sld [smem:[#allocation5 + $0x1]]
        %s203 = sld [smem:[#allocation5 + $0x2]]
        %s204 = smul.u32 0, 2
        %s205 = smul.addr %s204, 4
        %s206 = scalar_lea.vmem %s162, %s205 [#allocation9]
        %v207 = vld [vmem:[%s206] sm:$0xff]
        %v209 = vcombine.high %v207, %v207
        %vm211 = vcmask 1043456
        %v212 = vsel %vm211, %v207, -inf
        %v213 = vrot.slane %v212, 4
        %v214 = vmax.f32 %v212, %v213
        %v215 = vrot.slane %v214, 2
        %v216 = vmax.f32 %v214, %v215
        %v217 = vrot.slane %v216, 1
        %v218 = vmax.f32 %v216, %v217
        %v219 = vsel %vm211, %v209, -inf
        %v220 = vrot.slane %v219, 4
        %v221 = vmax.f32 %v219, %v220
        %v222 = vrot.slane %v221, 2
        %v223 = vmax.f32 %v221, %v222
        %v224 = vrot.slane %v223, 1
        %v225 = vmax.f32 %v223, %v224
        %v226 = vsel %vm211, %v207, 0.0
        %v227 = vrot.slane %v226, 4
        %v228 = vadd.f32 %v226, %v227
        %v229 = vrot.slane %v228, 2
        %v230 = vadd.f32 %v228, %v229
        %v231 = vrot.slane %v230, 1
        %v232 = vadd.f32 %v230, %v231
        %v233 = vsel %vm211, %v209, 0.0
        %v234 = vrot.slane %v233, 4
        %v235 = vadd.f32 %v233, %v234
        %v236 = vrot.slane %v235, 2
        %v237 = vadd.f32 %v235, %v236
        %v238 = vrot.slane %v237, 1
        %v239 = vadd.f32 %v237, %v238
        %v240 = vadd.f32 %v232, 0.0
        %v241 = vadd.f32 %v239, 0.0
        %v244 = vcombine.low %v218, %v225
        %v246 = vunpack.c.l.s4 1966171168
        %v247 = vunpack.c.0.s8 %v246
        %v248 = vlaneseq
        %v249 = vshrl.u32 %v248, 7
        %v250 = vsub.s32 %v247, %v249
        %v251 = vrot.slane %v244, %v250
        %v253 = vunpack.c.l.s4 1966171168
        %v254 = vunpack.c.0.s8 %v253
        %v255 = vlaneseq
        %v256 = vshrl.u32 %v255, 7
        %v257 = vsub.s32 %v254, %v256
        %v258 = vrot.slane %v251, %v257
        %v260 = vlaneseq
        %vm261 = vcmp.ge.s32.totalorder %v260, 0
        %vm262 = vcmp.lt.s32.totalorder %v260, 256
        %vm263 = vmand %vm261, %vm262
        %s264 = scalar_lea.vmem [#allocation2], 2
        %265 = vst.msk [vmem:[%s264] ss:$2 sm:$0x3] %vm263, %v258
        %v268 = vcombine.low %v240, %v241
        %v270 = vunpack.c.l.s4 1966171168
        %v271 = vunpack.c.0.s8 %v270
        %v272 = vlaneseq
        %v273 = vshrl.u32 %v272, 7
        %v274 = vsub.s32 %v271, %v273
        %v275 = vrot.slane %v268, %v274
        %v277 = vunpack.c.l.s4 1966171168
        %v278 = vunpack.c.0.s8 %v277
        %v279 = vlaneseq
        %v280 = vshrl.u32 %v279, 7
        %v281 = vsub.s32 %v278, %v280
        %v282 = vrot.slane %v275, %v281
        %s284 = scalar_lea.vmem [#allocation2], 3
        %285 = vst.msk [vmem:[%s284] ss:$2 sm:$0x3] %vm263, %v282
        %v286 = vld [vmem:[#allocation2] ss:$2 sm:$0xf]
        %s287 = scalar_lea.vmem [#allocation2], 1
        %v288 = vld [vmem:[%s287] ss:$2 sm:$0xf]
        %v289 = vstv %s201
        %v290 = vadd.f32 %v289, 0.0
        %s291 = sld [smem:[#allocation4]]
        %v292 = vstv %s291
        %v293 = vmul.f32 %v292, %v286
        %s294 = sld [smem:[#allocation4 + $0x31]]
        %v295 = vstv %s294
        %v296 = vmul.f32 %v295, %v288
        %v297 = vadd.f32 %v293, %v296
        %s298 = sld [smem:[#allocation4 + $0x7]]
        %v299 = vstv %s298
        %v300 = vmul.f32 %v299, %v286
        %s301 = sld [smem:[#allocation4 + $0x38]]
        %v302 = vstv %s301
        %v303 = vmul.f32 %v302, %v288
        %v304 = vadd.f32 %v300, %v303
        %306 = vrot.lane.b32.xlu0 %v304, 112
        %v307 = vpop.permute.xlu0 %306
        %v308 = vrot.slane %v307, 1
        %vm309 = vcmask 916480
        %v310 = vsel %vm309, %v307, %v308
        %v312 = vadd.f32 %v297, %v310
        %s313 = sld [smem:[#allocation4 + $0xe]]
        %v314 = vstv %s313
        %v315 = vmul.f32 %v314, %v286
        %s316 = sld [smem:[#allocation4 + $0x3f]]
        %v317 = vstv %s316
        %v318 = vmul.f32 %v317, %v288
        %v319 = vadd.f32 %v315, %v318
        %321 = vrot.lane.b32.xlu0 %v319, 96
        %v322 = vpop.permute.xlu0 %321
        %v323 = vrot.slane %v322, 1
        %vm324 = vcmask 785408
        %v325 = vsel %vm324, %v322, %v323
        %v327 = vadd.f32 %v312, %v325
        %s328 = sld [smem:[#allocation4 + $0x15]]
        %v329 = vstv %s328
        %v330 = vmul.f32 %v329, %v286
        %s331 = sld [smem:[#allocation4 + $0x46]]
        %v332 = vstv %s331
        %v333 = vmul.f32 %v332, %v288
        %v334 = vadd.f32 %v330, %v333
        %336 = vrot.lane.b32.xlu0 %v334, 80
        %v337 = vpop.permute.xlu0 %336
        %v338 = vrot.slane %v337, 1
        %vm339 = vcmask 654336
        %v340 = vsel %vm339, %v337, %v338
        %v342 = vadd.f32 %v327, %v340
        %s343 = sld [smem:[#allocation4 + $0x1c]]
        %v344 = vstv %s343
        %346 = vrot.lane.b32.xlu0 %v286, 115
        %v347 = vpop.permute.xlu0 %346
        %v348 = vrot.slane %v347, 1
        %v349 = vrot.slane %v347, 2
        %vm350 = vcmask 941056
        %v351 = vsel %vm350, %v348, %v349
        %v353 = vmul.f32 %v344, %v351
        %s354 = sld [smem:[#allocation4 + $0x4d]]
        %v355 = vstv %s354
        %357 = vrot.lane.b32.xlu0 %v288, 115
        %v358 = vpop.permute.xlu0 %357
        %v359 = vrot.slane %v358, 1
        %v360 = vrot.slane %v358, 2
        %v361 = vsel %vm350, %v359, %v360
        %v363 = vmul.f32 %v355, %v361
        %v364 = vadd.f32 %v353, %v363
        %366 = vrot.lane.b32.xlu0 %v364, 77
        %v367 = vpop.permute.xlu0 %366
        %v368 = vrot.slane %v367, 7
        %vm369 = vcmask 629760
        %v370 = vsel %vm369, %v368, %v367
        %v372 = vadd.f32 %v342, %v370
        %s373 = sld [smem:[#allocation4 + $0x23]]
        %v374 = vstv %s373
        %375 = vrot.lane.b32.xlu0 %v286, 99
        %v376 = vpop.permute.xlu0 %375
        %v377 = vrot.slane %v376, 1
        %v378 = vrot.slane %v376, 2
        %vm379 = vcmask 809984
        %v380 = vsel %vm379, %v377, %v378
        %v382 = vmul.f32 %v374, %v380
        %s383 = sld [smem:[#allocation4 + $0x54]]
        %v384 = vstv %s383
        %385 = vrot.lane.b32.xlu0 %v288, 99
        %v386 = vpop.permute.xlu0 %385
        %v387 = vrot.slane %v386, 1
        %v388 = vrot.slane %v386, 2
        %v389 = vsel %vm379, %v387, %v388
        %v391 = vmul.f32 %v384, %v389
        %v392 = vadd.f32 %v382, %v391
        %394 = vrot.lane.b32.xlu0 %v392, 77
        %v395 = vpop.permute.xlu0 %394
        %v396 = vrot.slane %v395, 7
        %v397 = vsel %vm369, %v396, %v395
        %v399 = vadd.f32 %v372, %v397
        %s400 = sld [smem:[#allocation4 + $0x2a]]
        %v401 = vstv %s400
        %402 = vrot.lane.b32.xlu0 %v286, 83
        %v403 = vpop.permute.xlu0 %402
        %v404 = vrot.slane %v403, 1
        %v405 = vrot.slane %v403, 2
        %vm406 = vcmask 678912
        %v407 = vsel %vm406, %v404, %v405
        %v409 = vmul.f32 %v401, %v407
        %s410 = sld [smem:[#allocation4 + $0x5b]]
        %v411 = vstv %s410
        %412 = vrot.lane.b32.xlu0 %v288, 83
        %v413 = vpop.permute.xlu0 %412
        %v414 = vrot.slane %v413, 1
        %v415 = vrot.slane %v413, 2
        %v416 = vsel %vm406, %v414, %v415
        %v418 = vmul.f32 %v411, %v416
        %v419 = vadd.f32 %v409, %v418
        %421 = vrot.lane.b32.xlu0 %v419, 77
        %v422 = vpop.permute.xlu0 %421
        %v423 = vrot.slane %v422, 7
        %v424 = vsel %vm369, %v423, %v422
        %v426 = vadd.f32 %v399, %v424
        %428 = vrot.lane.b32.xlu0 %v188, 77
        %v429 = vpop.permute.xlu0 %428
        %v430 = vrot.slane %v429, 7
        %v431 = vsel %vm369, %v430, %v429
        %v433 = vmul.f32 %v426, %v431
        %s434 = sld [smem:[#allocation4 + $0x1]]
        %v435 = vstv %s434
        %v436 = vmul.f32 %v435, %v286
        %s437 = sld [smem:[#allocation4 + $0x32]]
        %v438 = vstv %s437
        %v439 = vmul.f32 %v438, %v288
        %v440 = vadd.f32 %v436, %v439
        %s441 = sld [smem:[#allocation4 + $0x8]]
        %v442 = vstv %s441
        %v443 = vmul.f32 %v442, %v286
        %s444 = sld [smem:[#allocation4 + $0x39]]
        %v445 = vstv %s444
        %v446 = vmul.f32 %v445, %v288
        %v447 = vadd.f32 %v443, %v446
        %449 = vrot.lane.b32.xlu0 %v447, 112
        %v450 = vpop.permute.xlu0 %449
        %v451 = vrot.slane %v450, 1
        %v452 = vsel %vm309, %v450, %v451
        %v454 = vadd.f32 %v440, %v452
        %s455 = sld [smem:[#allocation4 + $0xf]]
        %v456 = vstv %s455
        %v457 = vmul.f32 %v456, %v286
        %s458 = sld [smem:[#allocation4 + $0x40]]
        %v459 = vstv %s458
        %v460 = vmul.f32 %v459, %v288
        %v461 = vadd.f32 %v457, %v460
        %463 = vrot.lane.b32.xlu0 %v461, 96
        %v464 = vpop.permute.xlu0 %463
        %v465 = vrot.slane %v464, 1
        %v466 = vsel %vm324, %v464, %v465
        %v468 = vadd.f32 %v454, %v466
        %s469 = sld [smem:[#allocation4 + $0x16]]
        %v470 = vstv %s469
        %v471 = vmul.f32 %v470, %v286
        %s472 = sld [smem:[#allocation4 + $0x47]]
        %v473 = vstv %s472
        %v474 = vmul.f32 %v473, %v288
        %v475 = vadd.f32 %v471, %v474
        %477 = vrot.lane.b32.xlu0 %v475, 80
        %v478 = vpop.permute.xlu0 %477
        %v479 = vrot.slane %v478, 1
        %v480 = vsel %vm339, %v478, %v479
        %v482 = vadd.f32 %v468, %v480
        %s483 = sld [smem:[#allocation4 + $0x1d]]
        %v484 = vstv %s483
        %485 = vrot.lane.b32.xlu0 %v286, 114
        %v486 = vpop.permute.xlu0 %485
        %v487 = vrot.slane %v486, 1
        %v488 = vrot.slane %v486, 2
        %vm489 = vcmask 932864
        %v490 = vsel %vm489, %v487, %v488
        %v492 = vmul.f32 %v484, %v490
        %s493 = sld [smem:[#allocation4 + $0x4e]]
        %v494 = vstv %s493
        %495 = vrot.lane.b32.xlu0 %v288, 114
        %v496 = vpop.permute.xlu0 %495
        %v497 = vrot.slane %v496, 1
        %v498 = vrot.slane %v496, 2
        %v499 = vsel %vm489, %v497, %v498
        %v501 = vmul.f32 %v494, %v499
        %v502 = vadd.f32 %v492, %v501
        %504 = vrot.lane.b32.xlu0 %v502, 78
        %v505 = vpop.permute.xlu0 %504
        %v506 = vrot.slane %v505, 7
        %vm507 = vcmask 637952
        %v508 = vsel %vm507, %v506, %v505
        %v510 = vadd.f32 %v482, %v508
        %s511 = sld [smem:[#allocation4 + $0x24]]
        %v512 = vstv %s511
        %513 = vrot.lane.b32.xlu0 %v286, 98
        %v514 = vpop.permute.xlu0 %513
        %v515 = vrot.slane %v514, 1
        %v516 = vrot.slane %v514, 2
        %vm517 = vcmask 801792
        %v518 = vsel %vm517, %v515, %v516
        %v520 = vmul.f32 %v512, %v518
        %s521 = sld [smem:[#allocation4 + $0x55]]
        %v522 = vstv %s521
        %523 = vrot.lane.b32.xlu0 %v288, 98
        %v524 = vpop.permute.xlu0 %523
        %v525 = vrot.slane %v524, 1
        %v526 = vrot.slane %v524, 2
        %v527 = vsel %vm517, %v525, %v526
        %v529 = vmul.f32 %v522, %v527
        %v530 = vadd.f32 %v520, %v529
        %532 = vrot.lane.b32.xlu0 %v530, 78
        %v533 = vpop.permute.xlu0 %532
        %v534 = vrot.slane %v533, 7
        %v535 = vsel %vm507, %v534, %v533
        %v537 = vadd.f32 %v510, %v535
        %s538 = sld [smem:[#allocation4 + $0x2b]]
        %v539 = vstv %s538
        %540 = vrot.lane.b32.xlu0 %v286, 82
        %v541 = vpop.permute.xlu0 %540
        %v542 = vrot.slane %v541, 1
        %v543 = vrot.slane %v541, 2
        %vm544 = vcmask 670720
        %v545 = vsel %vm544, %v542, %v543
        %v547 = vmul.f32 %v539, %v545
        %s548 = sld [smem:[#allocation4 + $0x5c]]
        %v549 = vstv %s548
        %550 = vrot.lane.b32.xlu0 %v288, 82
        %v551 = vpop.permute.xlu0 %550
        %v552 = vrot.slane %v551, 1
        %v553 = vrot.slane %v551, 2
        %v554 = vsel %vm544, %v552, %v553
        %v556 = vmul.f32 %v549, %v554
        %v557 = vadd.f32 %v547, %v556
        %559 = vrot.lane.b32.xlu0 %v557, 78
        %v560 = vpop.permute.xlu0 %559
        %v561 = vrot.slane %v560, 7
        %v562 = vsel %vm507, %v561, %v560
        %v564 = vadd.f32 %v537, %v562
        %566 = vrot.lane.b32.xlu0 %v190, 78
        %v567 = vpop.permute.xlu0 %566
        %v568 = vrot.slane %v567, 7
        %v569 = vsel %vm507, %v568, %v567
        %v571 = vmul.f32 %v564, %v569
        %s572 = sld [smem:[#allocation4 + $0x2]]
        %v573 = vstv %s572
        %v574 = vmul.f32 %v573, %v286
        %s575 = sld [smem:[#allocation4 + $0x33]]
        %v576 = vstv %s575
        %v577 = vmul.f32 %v576, %v288
        %v578 = vadd.f32 %v574, %v577
        %s579 = sld [smem:[#allocation4 + $0x9]]
        %v580 = vstv %s579
        %v581 = vmul.f32 %v580, %v286
        %s582 = sld [smem:[#allocation4 + $0x3a]]
        %v583 = vstv %s582
        %v584 = vmul.f32 %v583, %v288
        %v585 = vadd.f32 %v581, %v584
        %587 = vrot.lane.b32.xlu0 %v585, 112
        %v588 = vpop.permute.xlu0 %587
        %v589 = vrot.slane %v588, 1
        %v590 = vsel %vm309, %v588, %v589
        %v592 = vadd.f32 %v578, %v590
        %s593 = sld [smem:[#allocation4 + $0x10]]
        %v594 = vstv %s593
        %v595 = vmul.f32 %v594, %v286
        %s596 = sld [smem:[#allocation4 + $0x41]]
        %v597 = vstv %s596
        %v598 = vmul.f32 %v597, %v288
        %v599 = vadd.f32 %v595, %v598
        %601 = vrot.lane.b32.xlu0 %v599, 96
        %v602 = vpop.permute.xlu0 %601
        %v603 = vrot.slane %v602, 1
        %v604 = vsel %vm324, %v602, %v603
        %v606 = vadd.f32 %v592, %v604
        %s607 = sld [smem:[#allocation4 + $0x17]]
        %v608 = vstv %s607
        %v609 = vmul.f32 %v608, %v286
        %s610 = sld [smem:[#allocation4 + $0x48]]
        %v611 = vstv %s610
        %v612 = vmul.f32 %v611, %v288
        %v613 = vadd.f32 %v609, %v612
        %615 = vrot.lane.b32.xlu0 %v613, 80
        %v616 = vpop.permute.xlu0 %615
        %v617 = vrot.slane %v616, 1
        %v618 = vsel %vm339, %v616, %v617
        %v620 = vadd.f32 %v606, %v618
        %s621 = sld [smem:[#allocation4 + $0x1e]]
        %v622 = vstv %s621
        %623 = vrot.lane.b32.xlu0 %v286, 113
        %v624 = vpop.permute.xlu0 %623
        %v625 = vrot.slane %v624, 1
        %v626 = vrot.slane %v624, 2
        %vm627 = vcmask 924672
        %v628 = vsel %vm627, %v625, %v626
        %v630 = vmul.f32 %v622, %v628
        %s631 = sld [smem:[#allocation4 + $0x4f]]
        %v632 = vstv %s631
        %633 = vrot.lane.b32.xlu0 %v288, 113
        %v634 = vpop.permute.xlu0 %633
        %v635 = vrot.slane %v634, 1
        %v636 = vrot.slane %v634, 2
        %v637 = vsel %vm627, %v635, %v636
        %v639 = vmul.f32 %v632, %v637
        %v640 = vadd.f32 %v630, %v639
        %642 = vrot.lane.b32.xlu0 %v640, 79
        %v643 = vpop.permute.xlu0 %642
        %v644 = vrot.slane %v643, 7
        %vm645 = vcmask 646144
        %v646 = vsel %vm645, %v644, %v643
        %v648 = vadd.f32 %v620, %v646
        %s649 = sld [smem:[#allocation4 + $0x25]]
        %v650 = vstv %s649
        %651 = vrot.lane.b32.xlu0 %v286, 97
        %v652 = vpop.permute.xlu0 %651
        %v653 = vrot.slane %v652, 1
        %v654 = vrot.slane %v652, 2
        %vm655 = vcmask 793600
        %v656 = vsel %vm655, %v653, %v654
        %v658 = vmul.f32 %v650, %v656
        %s659 = sld [smem:[#allocation4 + $0x56]]
        %v660 = vstv %s659
        %661 = vrot.lane.b32.xlu0 %v288, 97
        %v662 = vpop.permute.xlu0 %661
        %v663 = vrot.slane %v662, 1
        %v664 = vrot.slane %v662, 2
        %v665 = vsel %vm655, %v663, %v664
        %v667 = vmul.f32 %v660, %v665
        %v668 = vadd.f32 %v658, %v667
        %670 = vrot.lane.b32.xlu0 %v668, 79
        %v671 = vpop.permute.xlu0 %670
        %v672 = vrot.slane %v671, 7
        %v673 = vsel %vm645, %v672, %v671
        %v675 = vadd.f32 %v648, %v673
        %s676 = sld [smem:[#allocation4 + $0x2c]]
        %v677 = vstv %s676
        %678 = vrot.lane.b32.xlu0 %v286, 81
        %v679 = vpop.permute.xlu0 %678
        %v680 = vrot.slane %v679, 1
        %v681 = vrot.slane %v679, 2
        %vm682 = vcmask 662528
        %v683 = vsel %vm682, %v680, %v681
        %v685 = vmul.f32 %v677, %v683
        %s686 = sld [smem:[#allocation4 + $0x5d]]
        %v687 = vstv %s686
        %688 = vrot.lane.b32.xlu0 %v288, 81
        %v689 = vpop.permute.xlu0 %688
        %v690 = vrot.slane %v689, 1
        %v691 = vrot.slane %v689, 2
        %v692 = vsel %vm682, %v690, %v691
        %v694 = vmul.f32 %v687, %v692
        %v695 = vadd.f32 %v685, %v694
        %697 = vrot.lane.b32.xlu0 %v695, 79
        %v698 = vpop.permute.xlu0 %697
        %v699 = vrot.slane %v698, 7
        %v700 = vsel %vm645, %v699, %v698
        %v702 = vadd.f32 %v675, %v700
        %704 = vrot.lane.b32.xlu0 %v192, 79
        %v705 = vpop.permute.xlu0 %704
        %v706 = vrot.slane %v705, 7
        %v707 = vsel %vm645, %v706, %v705
        %v709 = vmul.f32 %v702, %v707
        %s710 = sld [smem:[#allocation4 + $0x3]]
        %v711 = vstv %s710
        %v712 = vmul.f32 %v711, %v286
        %s713 = sld [smem:[#allocation4 + $0x34]]
        %v714 = vstv %s713
        %v715 = vmul.f32 %v714, %v288
        %v716 = vadd.f32 %v712, %v715
        %s717 = sld [smem:[#allocation4 + $0xa]]
        %v718 = vstv %s717
        %v719 = vmul.f32 %v718, %v286
        %s720 = sld [smem:[#allocation4 + $0x3b]]
        %v721 = vstv %s720
        %v722 = vmul.f32 %v721, %v288
        %v723 = vadd.f32 %v719, %v722
        %725 = vrot.lane.b32.xlu0 %v723, 112
        %v726 = vpop.permute.xlu0 %725
        %v727 = vrot.slane %v726, 1
        %v728 = vsel %vm309, %v726, %v727
        %v730 = vadd.f32 %v716, %v728
        %s731 = sld [smem:[#allocation4 + $0x11]]
        %v732 = vstv %s731
        %v733 = vmul.f32 %v732, %v286
        %s734 = sld [smem:[#allocation4 + $0x42]]
        %v735 = vstv %s734
        %v736 = vmul.f32 %v735, %v288
        %v737 = vadd.f32 %v733, %v736
        %739 = vrot.lane.b32.xlu0 %v737, 96
        %v740 = vpop.permute.xlu0 %739
        %v741 = vrot.slane %v740, 1
        %v742 = vsel %vm324, %v740, %v741
        %v744 = vadd.f32 %v730, %v742
        %s745 = sld [smem:[#allocation4 + $0x18]]
        %v746 = vstv %s745
        %v747 = vrot.slane %v286, 1
        %v749 = vmul.f32 %v746, %v747
        %s750 = sld [smem:[#allocation4 + $0x49]]
        %v751 = vstv %s750
        %v752 = vrot.slane %v288, 1
        %v754 = vmul.f32 %v751, %v752
        %v755 = vadd.f32 %v749, %v754
        %757 = vrot.lane.b32.xlu0 %v755, 80
        %v758 = vpop.permute.xlu0 %757
        %v759 = vrot.slane %v758, 7
        %v760 = vsel %vm339, %v759, %v758
        %v762 = vadd.f32 %v744, %v760
        %s763 = sld [smem:[#allocation4 + $0x1f]]
        %v764 = vstv %s763
        %765 = vrot.lane.b32.xlu0 %v286, 112
        %v766 = vpop.permute.xlu0 %765
        %v767 = vrot.slane %v766, 1
        %v768 = vrot.slane %v766, 2
        %v769 = vsel %vm309, %v767, %v768
        %v771 = vmul.f32 %v764, %v769
        %s772 = sld [smem:[#allocation4 + $0x50]]
        %v773 = vstv %s772
        %774 = vrot.lane.b32.xlu0 %v288, 112
        %v775 = vpop.permute.xlu0 %774
        %v776 = vrot.slane %v775, 1
        %v777 = vrot.slane %v775, 2
        %v778 = vsel %vm309, %v776, %v777
        %v780 = vmul.f32 %v773, %v778
        %v781 = vadd.f32 %v771, %v780
        %783 = vrot.lane.b32.xlu0 %v781, 80
        %v784 = vpop.permute.xlu0 %783
        %v785 = vrot.slane %v784, 7
        %v786 = vsel %vm339, %v785, %v784
        %v788 = vadd.f32 %v762, %v786
        %s789 = sld [smem:[#allocation4 + $0x26]]
        %v790 = vstv %s789
        %791 = vrot.lane.b32.xlu0 %v286, 96
        %v792 = vpop.permute.xlu0 %791
        %v793 = vrot.slane %v792, 1
        %v794 = vrot.slane %v792, 2
        %v795 = vsel %vm324, %v793, %v794
        %v797 = vmul.f32 %v790, %v795
        %s798 = sld [smem:[#allocation4 + $0x57]]
        %v799 = vstv %s798
        %800 = vrot.lane.b32.xlu0 %v288, 96
        %v801 = vpop.permute.xlu0 %800
        %v802 = vrot.slane %v801, 1
        %v803 = vrot.slane %v801, 2
        %v804 = vsel %vm324, %v802, %v803
        %v806 = vmul.f32 %v799, %v804
        %v807 = vadd.f32 %v797, %v806
        %809 = vrot.lane.b32.xlu0 %v807, 80
        %v810 = vpop.permute.xlu0 %809
        %v811 = vrot.slane %v810, 7
        %v812 = vsel %vm339, %v811, %v810
        %v814 = vadd.f32 %v788, %v812
        %s815 = sld [smem:[#allocation4 + $0x2d]]
        %v816 = vstv %s815
        %817 = vrot.lane.b32.xlu0 %v286, 80
        %v818 = vpop.permute.xlu0 %817
        %v819 = vrot.slane %v818, 1
        %v820 = vrot.slane %v818, 2
        %v821 = vsel %vm339, %v819, %v820
        %v823 = vmul.f32 %v816, %v821
        %s824 = sld [smem:[#allocation4 + $0x5e]]
        %v825 = vstv %s824
        %826 = vrot.lane.b32.xlu0 %v288, 80
        %v827 = vpop.permute.xlu0 %826
        %v828 = vrot.slane %v827, 1
        %v829 = vrot.slane %v827, 2
        %v830 = vsel %vm339, %v828, %v829
        %v832 = vmul.f32 %v825, %v830
        %v833 = vadd.f32 %v823, %v832
        %835 = vrot.lane.b32.xlu0 %v833, 80
        %v836 = vpop.permute.xlu0 %835
        %v837 = vrot.slane %v836, 7
        %v838 = vsel %vm339, %v837, %v836
        %v840 = vadd.f32 %v814, %v838
        %842 = vrot.lane.b32.xlu0 %v194, 80
        %v843 = vpop.permute.xlu0 %842
        %v844 = vrot.slane %v843, 7
        %v845 = vsel %vm339, %v844, %v843
        %v847 = vmul.f32 %v840, %v845
        %s848 = sld [smem:[#allocation4 + $0x4]]
        %v849 = vstv %s848
        %v850 = vmul.f32 %v849, %v286
        %s851 = sld [smem:[#allocation4 + $0x35]]
        %v852 = vstv %s851
        %v853 = vmul.f32 %v852, %v288
        %v854 = vadd.f32 %v850, %v853
        %s855 = sld [smem:[#allocation4 + $0xb]]
        %v856 = vstv %s855
        %v857 = vmul.f32 %v856, %v286
        %s858 = sld [smem:[#allocation4 + $0x3c]]
        %v859 = vstv %s858
        %v860 = vmul.f32 %v859, %v288
        %v861 = vadd.f32 %v857, %v860
        %863 = vrot.lane.b32.xlu0 %v861, 112
        %v864 = vpop.permute.xlu0 %863
        %v865 = vrot.slane %v864, 1
        %v866 = vsel %vm309, %v864, %v865
        %v868 = vadd.f32 %v854, %v866
        %s869 = sld [smem:[#allocation4 + $0x12]]
        %v870 = vstv %s869
        %v871 = vmul.f32 %v870, %v286
        %s872 = sld [smem:[#allocation4 + $0x43]]
        %v873 = vstv %s872
        %v874 = vmul.f32 %v873, %v288
        %v875 = vadd.f32 %v871, %v874
        %877 = vrot.lane.b32.xlu0 %v875, 96
        %v878 = vpop.permute.xlu0 %877
        %v879 = vrot.slane %v878, 1
        %v880 = vsel %vm324, %v878, %v879
        %v882 = vadd.f32 %v868, %v880
        %s883 = sld [smem:[#allocation4 + $0x19]]
        %v884 = vstv %s883
        %885 = vrot.lane.b32.xlu0 %v286, 127
        %v886 = vpop.permute.xlu0 %885
        %v887 = vrot.slane %v886, 1
        %v888 = vrot.slane %v886, 2
        %vm889 = vcmask 1039360
        %v890 = vsel %vm889, %v887, %v888
        %v892 = vmul.f32 %v884, %v890
        %s893 = sld [smem:[#allocation4 + $0x4a]]
        %v894 = vstv %s893
        %895 = vrot.lane.b32.xlu0 %v288, 127
        %v896 = vpop.permute.xlu0 %895
        %v897 = vrot.slane %v896, 1
        %v898 = vrot.slane %v896, 2
        %v899 = vsel %vm889, %v897, %v898
        %v901 = vmul.f32 %v894, %v899
        %v902 = vadd.f32 %v892, %v901
        %904 = vrot.lane.b32.xlu0 %v902, 81
        %v905 = vpop.permute.xlu0 %904
        %v906 = vrot.slane %v905, 7
        %v907 = vsel %vm682, %v906, %v905
        %v909 = vadd.f32 %v882, %v907
        %s910 = sld [smem:[#allocation4 + $0x20]]
        %v911 = vstv %s910
        %912 = vrot.lane.b32.xlu0 %v286, 111
        %v913 = vpop.permute.xlu0 %912
        %v914 = vrot.slane %v913, 1
        %v915 = vrot.slane %v913, 2
        %vm916 = vcmask 908288
        %v917 = vsel %vm916, %v914, %v915
        %v919 = vmul.f32 %v911, %v917
        %s920 = sld [smem:[#allocation4 + $0x51]]
        %v921 = vstv %s920
        %922 = vrot.lane.b32.xlu0 %v288, 111
        %v923 = vpop.permute.xlu0 %922
        %v924 = vrot.slane %v923, 1
        %v925 = vrot.slane %v923, 2
        %v926 = vsel %vm916, %v924, %v925
        %v928 = vmul.f32 %v921, %v926
        %v929 = vadd.f32 %v919, %v928
        %931 = vrot.lane.b32.xlu0 %v929, 81
        %v932 = vpop.permute.xlu0 %931
        %v933 = vrot.slane %v932, 7
        %v934 = vsel %vm682, %v933, %v932
        %v936 = vadd.f32 %v909, %v934
        %s937 = sld [smem:[#allocation4 + $0x27]]
        %v938 = vstv %s937
        %939 = vrot.lane.b32.xlu0 %v286, 95
        %v940 = vpop.permute.xlu0 %939
        %v941 = vrot.slane %v940, 1
        %v942 = vrot.slane %v940, 2
        %vm943 = vcmask 777216
        %v944 = vsel %vm943, %v941, %v942
        %v946 = vmul.f32 %v938, %v944
        %s947 = sld [smem:[#allocation4 + $0x58]]
        %v948 = vstv %s947
        %949 = vrot.lane.b32.xlu0 %v288, 95
        %v950 = vpop.permute.xlu0 %949
        %v951 = vrot.slane %v950, 1
        %v952 = vrot.slane %v950, 2
        %v953 = vsel %vm943, %v951, %v952
        %v955 = vmul.f32 %v948, %v953
        %v956 = vadd.f32 %v946, %v955
        %958 = vrot.lane.b32.xlu0 %v956, 81
        %v959 = vpop.permute.xlu0 %958
        %v960 = vrot.slane %v959, 7
        %v961 = vsel %vm682, %v960, %v959
        %v963 = vadd.f32 %v936, %v961
        %s964 = sld [smem:[#allocation4 + $0x2e]]
        %v965 = vstv %s964
        %966 = vrot.lane.b32.xlu0 %v286, 79
        %v967 = vpop.permute.xlu0 %966
        %v968 = vrot.slane %v967, 1
        %v969 = vrot.slane %v967, 2
        %v970 = vsel %vm645, %v968, %v969
        %v972 = vmul.f32 %v965, %v970
        %s973 = sld [smem:[#allocation4 + $0x5f]]
        %v974 = vstv %s973
        %975 = vrot.lane.b32.xlu0 %v288, 79
        %v976 = vpop.permute.xlu0 %975
        %v977 = vrot.slane %v976, 1
        %v978 = vrot.slane %v976, 2
        %v979 = vsel %vm645, %v977, %v978
        %v981 = vmul.f32 %v974, %v979
        %v982 = vadd.f32 %v972, %v981
        %984 = vrot.lane.b32.xlu0 %v982, 81
        %v985 = vpop.permute.xlu0 %984
        %v986 = vrot.slane %v985, 7
        %v987 = vsel %vm682, %v986, %v985
        %v989 = vadd.f32 %v963, %v987
        %991 = vrot.lane.b32.xlu0 %v196, 81
        %v992 = vpop.permute.xlu0 %991
        %v993 = vrot.slane %v992, 7
        %v994 = vsel %vm682, %v993, %v992
        %v996 = vmul.f32 %v989, %v994
        %s997 = sld [smem:[#allocation4 + $0x5]]
        %v998 = vstv %s997
        %v999 = vmul.f32 %v998, %v286
        %s1000 = sld [smem:[#allocation4 + $0x36]]
        %v1001 = vstv %s1000
        %v1002 = vmul.f32 %v1001, %v288
        %v1003 = vadd.f32 %v999, %v1002
        %s1004 = sld [smem:[#allocation4 + $0xc]]
        %v1005 = vstv %s1004
        %v1006 = vmul.f32 %v1005, %v286
        %s1007 = sld [smem:[#allocation4 + $0x3d]]
        %v1008 = vstv %s1007
        %v1009 = vmul.f32 %v1008, %v288
        %v1010 = vadd.f32 %v1006, %v1009
        %1012 = vrot.lane.b32.xlu0 %v1010, 112
        %v1013 = vpop.permute.xlu0 %1012
        %v1014 = vrot.slane %v1013, 1
        %v1015 = vsel %vm309, %v1013, %v1014
        %v1017 = vadd.f32 %v1003, %v1015
        %s1018 = sld [smem:[#allocation4 + $0x13]]
        %v1019 = vstv %s1018
        %v1020 = vmul.f32 %v1019, %v286
        %s1021 = sld [smem:[#allocation4 + $0x44]]
        %v1022 = vstv %s1021
        %v1023 = vmul.f32 %v1022, %v288
        %v1024 = vadd.f32 %v1020, %v1023
        %1026 = vrot.lane.b32.xlu0 %v1024, 96
        %v1027 = vpop.permute.xlu0 %1026
        %v1028 = vrot.slane %v1027, 1
        %v1029 = vsel %vm324, %v1027, %v1028
        %v1031 = vadd.f32 %v1017, %v1029
        %s1032 = sld [smem:[#allocation4 + $0x1a]]
        %v1033 = vstv %s1032
        %1034 = vrot.lane.b32.xlu0 %v286, 126
        %v1035 = vpop.permute.xlu0 %1034
        %v1036 = vrot.slane %v1035, 1
        %v1037 = vrot.slane %v1035, 2
        %vm1038 = vcmask 1031168
        %v1039 = vsel %vm1038, %v1036, %v1037
        %v1041 = vmul.f32 %v1033, %v1039
        %s1042 = sld [smem:[#allocation4 + $0x4b]]
        %v1043 = vstv %s1042
        %1044 = vrot.lane.b32.xlu0 %v288, 126
        %v1045 = vpop.permute.xlu0 %1044
        %v1046 = vrot.slane %v1045, 1
        %v1047 = vrot.slane %v1045, 2
        %v1048 = vsel %vm1038, %v1046, %v1047
        %v1050 = vmul.f32 %v1043, %v1048
        %v1051 = vadd.f32 %v1041, %v1050
        %1053 = vrot.lane.b32.xlu0 %v1051, 82
        %v1054 = vpop.permute.xlu0 %1053
        %v1055 = vrot.slane %v1054, 7
        %v1056 = vsel %vm544, %v1055, %v1054
        %v1058 = vadd.f32 %v1031, %v1056
        %s1059 = sld [smem:[#allocation4 + $0x21]]
        %v1060 = vstv %s1059
        %1061 = vrot.lane.b32.xlu0 %v286, 110
        %v1062 = vpop.permute.xlu0 %1061
        %v1063 = vrot.slane %v1062, 1
        %v1064 = vrot.slane %v1062, 2
        %vm1065 = vcmask 900096
        %v1066 = vsel %vm1065, %v1063, %v1064
        %v1068 = vmul.f32 %v1060, %v1066
        %s1069 = sld [smem:[#allocation4 + $0x52]]
        %v1070 = vstv %s1069
        %1071 = vrot.lane.b32.xlu0 %v288, 110
        %v1072 = vpop.permute.xlu0 %1071
        %v1073 = vrot.slane %v1072, 1
        %v1074 = vrot.slane %v1072, 2
        %v1075 = vsel %vm1065, %v1073, %v1074
        %v1077 = vmul.f32 %v1070, %v1075
        %v1078 = vadd.f32 %v1068, %v1077
        %1080 = vrot.lane.b32.xlu0 %v1078, 82
        %v1081 = vpop.permute.xlu0 %1080
        %v1082 = vrot.slane %v1081, 7
        %v1083 = vsel %vm544, %v1082, %v1081
        %v1085 = vadd.f32 %v1058, %v1083
        %s1086 = sld [smem:[#allocation4 + $0x28]]
        %v1087 = vstv %s1086
        %1088 = vrot.lane.b32.xlu0 %v286, 94
        %v1089 = vpop.permute.xlu0 %1088
        %v1090 = vrot.slane %v1089, 1
        %v1091 = vrot.slane %v1089, 2
        %vm1092 = vcmask 769024
        %v1093 = vsel %vm1092, %v1090, %v1091
        %v1095 = vmul.f32 %v1087, %v1093
        %s1096 = sld [smem:[#allocation4 + $0x59]]
        %v1097 = vstv %s1096
        %1098 = vrot.lane.b32.xlu0 %v288, 94
        %v1099 = vpop.permute.xlu0 %1098
        %v1100 = vrot.slane %v1099, 1
        %v1101 = vrot.slane %v1099, 2
        %v1102 = vsel %vm1092, %v1100, %v1101
        %v1104 = vmul.f32 %v1097, %v1102
        %v1105 = vadd.f32 %v1095, %v1104
        %1107 = vrot.lane.b32.xlu0 %v1105, 82
        %v1108 = vpop.permute.xlu0 %1107
        %v1109 = vrot.slane %v1108, 7
        %v1110 = vsel %vm544, %v1109, %v1108
        %v1112 = vadd.f32 %v1085, %v1110
        %s1113 = sld [smem:[#allocation4 + $0x2f]]
        %v1114 = vstv %s1113
        %1115 = vrot.lane.b32.xlu0 %v286, 78
        %v1116 = vpop.permute.xlu0 %1115
        %v1117 = vrot.slane %v1116, 1
        %v1118 = vrot.slane %v1116, 2
        %v1119 = vsel %vm507, %v1117, %v1118
        %v1121 = vmul.f32 %v1114, %v1119
        %s1122 = sld [smem:[#allocation4 + $0x60]]
        %v1123 = vstv %s1122
        %1124 = vrot.lane.b32.xlu0 %v288, 78
        %v1125 = vpop.permute.xlu0 %1124
        %v1126 = vrot.slane %v1125, 1
        %v1127 = vrot.slane %v1125, 2
        %v1128 = vsel %vm507, %v1126, %v1127
        %v1130 = vmul.f32 %v1123, %v1128
        %v1131 = vadd.f32 %v1121, %v1130
        %1133 = vrot.lane.b32.xlu0 %v1131, 82
        %v1134 = vpop.permute.xlu0 %1133
        %v1135 = vrot.slane %v1134, 7
        %v1136 = vsel %vm544, %v1135, %v1134
        %v1138 = vadd.f32 %v1112, %v1136
        %1140 = vrot.lane.b32.xlu0 %v198, 82
        %v1141 = vpop.permute.xlu0 %1140
        %v1142 = vrot.slane %v1141, 7
        %v1143 = vsel %vm544, %v1142, %v1141
        %v1145 = vmul.f32 %v1138, %v1143
        %s1146 = sld [smem:[#allocation4 + $0x6]]
        %v1147 = vstv %s1146
        %v1148 = vmul.f32 %v1147, %v286
        %s1149 = sld [smem:[#allocation4 + $0x37]]
        %v1150 = vstv %s1149
        %v1151 = vmul.f32 %v1150, %v288
        %v1152 = vadd.f32 %v1148, %v1151
        %s1153 = sld [smem:[#allocation4 + $0xd]]
        %v1154 = vstv %s1153
        %v1155 = vmul.f32 %v1154, %v286
        %s1156 = sld [smem:[#allocation4 + $0x3e]]
        %v1157 = vstv %s1156
        %v1158 = vmul.f32 %v1157, %v288
        %v1159 = vadd.f32 %v1155, %v1158
        %1161 = vrot.lane.b32.xlu0 %v1159, 112
        %v1162 = vpop.permute.xlu0 %1161
        %v1163 = vrot.slane %v1162, 1
        %v1164 = vsel %vm309, %v1162, %v1163
        %v1166 = vadd.f32 %v1152, %v1164
        %s1167 = sld [smem:[#allocation4 + $0x14]]
        %v1168 = vstv %s1167
        %v1169 = vmul.f32 %v1168, %v286
        %s1170 = sld [smem:[#allocation4 + $0x45]]
        %v1171 = vstv %s1170
        %v1172 = vmul.f32 %v1171, %v288
        %v1173 = vadd.f32 %v1169, %v1172
        %1175 = vrot.lane.b32.xlu0 %v1173, 96
        %v1176 = vpop.permute.xlu0 %1175
        %v1177 = vrot.slane %v1176, 1
        %v1178 = vsel %vm324, %v1176, %v1177
        %v1180 = vadd.f32 %v1166, %v1178
        %s1181 = sld [smem:[#allocation4 + $0x1b]]
        %v1182 = vstv %s1181
        %1183 = vrot.lane.b32.xlu0 %v286, 125
        %v1184 = vpop.permute.xlu0 %1183
        %v1185 = vrot.slane %v1184, 1
        %v1186 = vrot.slane %v1184, 2
        %vm1187 = vcmask 1022976
        %v1188 = vsel %vm1187, %v1185, %v1186
        %v1190 = vmul.f32 %v1182, %v1188
        %s1191 = sld [smem:[#allocation4 + $0x4c]]
        %v1192 = vstv %s1191
        %1193 = vrot.lane.b32.xlu0 %v288, 125
        %v1194 = vpop.permute.xlu0 %1193
        %v1195 = vrot.slane %v1194, 1
        %v1196 = vrot.slane %v1194, 2
        %v1197 = vsel %vm1187, %v1195, %v1196
        %v1199 = vmul.f32 %v1192, %v1197
        %v1200 = vadd.f32 %v1190, %v1199
        %1202 = vrot.lane.b32.xlu0 %v1200, 83
        %v1203 = vpop.permute.xlu0 %1202
        %v1204 = vrot.slane %v1203, 7
        %v1205 = vsel %vm406, %v1204, %v1203
        %v1207 = vadd.f32 %v1180, %v1205
        %s1208 = sld [smem:[#allocation4 + $0x22]]
        %v1209 = vstv %s1208
        %1210 = vrot.lane.b32.xlu0 %v286, 109
        %v1211 = vpop.permute.xlu0 %1210
        %v1212 = vrot.slane %v1211, 1
        %v1213 = vrot.slane %v1211, 2
        %vm1214 = vcmask 891904
        %v1215 = vsel %vm1214, %v1212, %v1213
        %v1217 = vmul.f32 %v1209, %v1215
        %s1218 = sld [smem:[#allocation4 + $0x53]]
        %v1219 = vstv %s1218
        %1220 = vrot.lane.b32.xlu0 %v288, 109
        %v1221 = vpop.permute.xlu0 %1220
        %v1222 = vrot.slane %v1221, 1
        %v1223 = vrot.slane %v1221, 2
        %v1224 = vsel %vm1214, %v1222, %v1223
        %v1226 = vmul.f32 %v1219, %v1224
        %v1227 = vadd.f32 %v1217, %v1226
        %1229 = vrot.lane.b32.xlu0 %v1227, 83
        %v1230 = vpop.permute.xlu0 %1229
        %v1231 = vrot.slane %v1230, 7
        %v1232 = vsel %vm406, %v1231, %v1230
        %v1234 = vadd.f32 %v1207, %v1232
        %s1235 = sld [smem:[#allocation4 + $0x29]]
        %v1236 = vstv %s1235
        %1237 = vrot.lane.b32.xlu0 %v286, 93
        %v1238 = vpop.permute.xlu0 %1237
        %v1239 = vrot.slane %v1238, 1
        %v1240 = vrot.slane %v1238, 2
        %vm1241 = vcmask 760832
        %v1242 = vsel %vm1241, %v1239, %v1240
        %v1244 = vmul.f32 %v1236, %v1242
        %s1245 = sld [smem:[#allocation4 + $0x5a]]
        %v1246 = vstv %s1245
        %1247 = vrot.lane.b32.xlu0 %v288, 93
        %v1248 = vpop.permute.xlu0 %1247
        %v1249 = vrot.slane %v1248, 1
        %v1250 = vrot.slane %v1248, 2
        %v1251 = vsel %vm1241, %v1249, %v1250
        %v1253 = vmul.f32 %v1246, %v1251
        %v1254 = vadd.f32 %v1244, %v1253
        %1256 = vrot.lane.b32.xlu0 %v1254, 83
        %v1257 = vpop.permute.xlu0 %1256
        %v1258 = vrot.slane %v1257, 7
        %v1259 = vsel %vm406, %v1258, %v1257
        %v1261 = vadd.f32 %v1234, %v1259
        %s1262 = sld [smem:[#allocation4 + $0x30]]
        %v1263 = vstv %s1262
        %1264 = vrot.lane.b32.xlu0 %v286, 77
        %v1265 = vpop.permute.xlu0 %1264
        %v1266 = vrot.slane %v1265, 1
        %v1267 = vrot.slane %v1265, 2
        %v1268 = vsel %vm369, %v1266, %v1267
        %v1270 = vmul.f32 %v1263, %v1268
        %s1271 = sld [smem:[#allocation4 + $0x61]]
        %v1272 = vstv %s1271
        %1273 = vrot.lane.b32.xlu0 %v288, 77
        %v1274 = vpop.permute.xlu0 %1273
        %v1275 = vrot.slane %v1274, 1
        %v1276 = vrot.slane %v1274, 2
        %v1277 = vsel %vm369, %v1275, %v1276
        %v1279 = vmul.f32 %v1272, %v1277
        %v1280 = vadd.f32 %v1270, %v1279
        %1282 = vrot.lane.b32.xlu0 %v1280, 83
        %v1283 = vpop.permute.xlu0 %1282
        %v1284 = vrot.slane %v1283, 7
        %v1285 = vsel %vm406, %v1284, %v1283
        %v1287 = vadd.f32 %v1261, %v1285
        %1289 = vrot.lane.b32.xlu0 %v200, 83
        %v1290 = vpop.permute.xlu0 %1289
        %v1291 = vrot.slane %v1290, 7
        %v1292 = vsel %vm406, %v1291, %v1290
        %v1294 = vmul.f32 %v1287, %v1292
        %v1295 = vadd.f32 %v290, %v433
        %1297 = vrot.lane.b32.xlu0 %v709, 127
        %v1298 = vpop.permute.xlu0 %1297
        %v1299 = vrot.slane %v1298, 1
        %v1300 = vsel %vm889, %v1298, %v1299
        %v1302 = vadd.f32 %v571, %v1300
        %1304 = vrot.lane.b32.xlu0 %v996, 127
        %v1305 = vpop.permute.xlu0 %1304
        %v1306 = vrot.slane %v1305, 1
        %v1307 = vsel %vm889, %v1305, %v1306
        %v1309 = vadd.f32 %v847, %v1307
        %1311 = vrot.lane.b32.xlu0 %v1294, 127
        %v1312 = vpop.permute.xlu0 %1311
        %v1313 = vrot.slane %v1312, 1
        %v1314 = vsel %vm889, %v1312, %v1313
        %v1316 = vadd.f32 %v1145, %v1314
        %1318 = vrot.lane.b32.xlu0 %v1302, 127
        %v1319 = vpop.permute.xlu0 %1318
        %v1320 = vrot.slane %v1319, 1
        %v1321 = vsel %vm889, %v1319, %v1320
        %v1323 = vadd.f32 %v1295, %v1321
        %1325 = vrot.lane.b32.xlu0 %v1316, 126
        %v1326 = vpop.permute.xlu0 %1325
        %v1327 = vrot.slane %v1326, 1
        %v1328 = vsel %vm1038, %v1326, %v1327
        %v1330 = vadd.f32 %v1309, %v1328
        %1332 = vrot.lane.b32.xlu0 %v1330, 125
        %v1333 = vpop.permute.xlu0 %1332
        %v1334 = vrot.slane %v1333, 1
        %v1335 = vsel %vm1187, %v1333, %v1334
        %v1337 = vadd.f32 %v1323, %v1335
        %v1339 = vlaneseq
        %v1340 = vshrl.u32 %v1339, 7
        %v1341 = vsub.s32 0, %v1340
        %v1342 = vrot.slane %v1337, %v1341
        %v1343 = vlaneseq
        %v1344 = vshrl.u32 %v1343, 7
        %v1345 = vsub.s32 1, %v1344
        %v1346 = vrot.slane %v1337, %v1345
        %v1347 = vlaneseq
        %v1348 = vshrl.u32 %v1347, 7
        %v1349 = vsub.s32 2, %v1348
        %v1350 = vrot.slane %v1337, %v1349
        %1351 = vrot.lane.b32.xlu0 %v1342, 51
        %v1352 = vpop.permute.xlu0 %1351
        %1353 = vrot.lane.b32.xlu0 %v1346, 51
        %v1354 = vpop.permute.xlu0 %1353
        %1355 = vrot.lane.b32.xlu0 %v1350, 51
        %v1356 = vpop.permute.xlu0 %1355
        %vm1357 = vcmask 416768
        %v1358 = vsel %vm1357, %v1352, %v1354
        %v1359 = vsel %vm1357, %v1354, %v1356
        %vm1362 = vcmask 1040384
        %v1363 = vsel %vm1362, %v1358, 0.0
        %v1364 = vsel %vm1362, %v1359, 0.0
        %v1365 = vadd.f32 %v1363, %v1364
        %1366 = vadd.xlane.f32.xlu0 %v1365
        %v1367 = vpop.xlane.xlu0 %1366
        %v1368 = vrot.slane %v1367, 4
        %v1369 = vadd.f32 %v1367, %v1368
        %v1370 = vrot.slane %v1369, 2
        %v1371 = vadd.f32 %v1369, %v1370
        %v1372 = vrot.slane %v1371, 1
        %v1373 = vadd.f32 %v1371, %v1372
        %s1374 = vtos %v1373
        %v1375 = vstv %s1374
        %v1376 = vrcp.pop 256.0
        %v1377 = vmul.f32 %v1375, %v1376
        %v1378 = vsub.f32 %v1337, %v1377
        %v1379 = vmul.f32 %v1378, %v1378
        %v1381 = vlaneseq
        %v1382 = vshrl.u32 %v1381, 7
        %v1383 = vsub.s32 0, %v1382
        %v1384 = vrot.slane %v1379, %v1383
        %v1385 = vlaneseq
        %v1386 = vshrl.u32 %v1385, 7
        %v1387 = vsub.s32 1, %v1386
        %v1388 = vrot.slane %v1379, %v1387
        %v1389 = vlaneseq
        %v1390 = vshrl.u32 %v1389, 7
        %v1391 = vsub.s32 2, %v1390
        %v1392 = vrot.slane %v1379, %v1391
        %1393 = vrot.lane.b32.xlu0 %v1384, 51
        %v1394 = vpop.permute.xlu0 %1393
        %1395 = vrot.lane.b32.xlu0 %v1388, 51
        %v1396 = vpop.permute.xlu0 %1395
        %1397 = vrot.lane.b32.xlu0 %v1392, 51
        %v1398 = vpop.permute.xlu0 %1397
        %v1399 = vsel %vm1357, %v1394, %v1396
        %v1400 = vsel %vm1357, %v1396, %v1398
        %v1403 = vsel %vm1362, %v1399, 0.0
        %v1404 = vsel %vm1362, %v1400, 0.0
        %v1405 = vadd.f32 %v1403, %v1404
        %1406 = vadd.xlane.f32.xlu0 %v1405
        %v1407 = vpop.xlane.xlu0 %1406
        %v1408 = vrot.slane %v1407, 4
        %v1409 = vadd.f32 %v1407, %v1408
        %v1410 = vrot.slane %v1409, 2
        %v1411 = vadd.f32 %v1409, %v1410
        %v1412 = vrot.slane %v1411, 1
        %v1413 = vadd.f32 %v1411, %v1412
        %s1414 = vtos %v1413
        %v1415 = vstv %s1414
        %v1416 = vmul.f32 %v1415, %v1376
        %v1417 = vadd.f32 %v1416, 1e-05
        %v1418 = vrsqrt.pop %v1417
        %v1419 = vmul.f32 %v1378, %v1418
        %v1420 = vstv %s202
        %v1421 = vmul.f32 %v1420, %v1419
        %v1422 = vstv %s203
        %v1423 = vadd.f32 %v1421, %v1422
        %v1424 = vxor.u32 %v1423, 2147483648
        %v1425 = vmul.f32 %v1424, 1.442695
        %v1426 = vpow.pop %v1425
        %v1427 = vadd.f32 %v1426, 1.0
        %v1428 = vrcp.pop %v1427
        %v1429 = vmul.f32 1.0, %v1428
        %v1430 = vld [vmem:[%s162] sm:$0xff]
        %v1432 = vlaneseq
        %v1433 = vshrl.u32 %v1432, 7
        %v1434 = vsub.s32 0, %v1433
        %v1435 = vrot.slane %v1429, %v1434
        %v1436 = vlaneseq
        %v1437 = vshrl.u32 %v1436, 7
        %v1438 = vsub.s32 1, %v1437
        %v1439 = vrot.slane %v1429, %v1438
        %v1440 = vlaneseq
        %v1441 = vshrl.u32 %v1440, 7
        %v1442 = vsub.s32 2, %v1441
        %v1443 = vrot.slane %v1429, %v1442
        %v1444 = vcombine.low %v1435, %v1439
        %1445 = vrot.lane.b32.xlu0 %v1444, 51
        %v1446 = vpop.permute.xlu0 %1445
        %1447 = vrot.lane.b32.xlu0 %v1443, 51
        %v1448 = vpop.permute.xlu0 %1447
        %v1449 = vrot.slane %v1446, 4
        %v1450 = vrot.slane %v1448, 4
        %v1451 = vsel %vm211, %v1449, %v1450
        %v1452 = vsel %vm1357, %v1446, %v1451
        %v1454 = vmul.f32 %v1430, %v1452
        %1455 = vst [vmem:[%s182] sm:$0xff] %v1454
        %s1456 = sand.u32 %s85, 1
        %s1457 = scalar_lea.sflag [#allocation8], %s1456
        %s1458 = sand.u32 %s85, 1
        %s1459 = smul.addr %s1458, 8
        %s1460 = scalar_lea.vmem [#allocation11], %s1459
        // Predicated region
        $region37: #{tpu_custom_call.1} parent=27 // pred_check
          %p1461 = pneg %p95
        $region38: #{tpu_custom_call.1} parent=27 // pred_check_branch
          %1463 = sbr.rel (%p1461) target = $region40
        $region39: #{tpu_custom_call.1} parent=27 // pred_region
          %s1465 = ssub.s32 128, 128
          %1466 = vsyncadd %s1457, %s1465
          %s1467 = smul.addr %s30, 2
          %s1468 = smul.addr %s1467, 64
          %s1469 = scalar_lea.hbm %s4, %s1468
          %s1471 = sshll.u32 %s1460, 4
          %s1472 = int_to_ptr.vmem [resolvable:$true] %s1471
          %1474 = dma.vmem_to_hbm [thread:$0]  %s1472, 128, %s1469, %s1457
        $region40: #{tpu_custom_call.1} parent=27 // pred_fallthru
          _
      $region28: #{tpu_custom_call.1} parent=5 // pred_fallthru
        _
      %p1475 = scmp.le.s32.totalorder 2, %s25
      // Predicated region
      $region41: #{tpu_custom_call.1} parent=5 // pred_check
        %p1476 = pneg %p1475
      $region42: #{tpu_custom_call.1} parent=5 // pred_check_branch
        %1478 = sbr.rel (%p1476) target = $region44
      $region43: #{tpu_custom_call.1} parent=5 // pred_region
        %s1479 = ssub.s32 %s25, 2
        // Predicated region
        $region45: #{tpu_custom_call.1} parent=43 // pred_check
          %p1480 = pneg %p101
        $region46: #{tpu_custom_call.1} parent=43 // pred_check_branch
          %1482 = sbr.rel (%p1480) target = $region48
        $region47: #{tpu_custom_call.1} parent=43 // pred_region
          %s1483 = sand.u32 %s86, 1
          %s1484 = scalar_lea.sflag [#allocation8], %s1483
          %s1485 = sand.u32 %s86, 1
          %s1486 = smul.addr %s1485, 8
          %s1487 = scalar_lea.vmem [#allocation11], %s1486
          %1488 = dma.done %s1484, 128
        $region48: #{tpu_custom_call.1} parent=43 // pred_fallthru
          _
      $region44: #{tpu_custom_call.1} parent=5 // pred_fallthru
        _
    $region6: #{tpu_custom_call.1} parent=1 // loop_footer
      %s29 = sadd.s32 1, %s25
    $region7: #{tpu_custom_call.1} parent=1 // loop_footer_branch
      %24 = sbr.rel target = $region3
    $region8: #{tpu_custom_call.1} parent=1 // loop_exit
      _
    %1489 = vsyncpa [#allocation7], 1
    %s1490 = scalar_lea.sflag [#allocation7], 1
    %1491 = vsyncpa %s1490, 1
    %1492 = vsyncpa [#allocation10], 1
    %s1493 = scalar_lea.sflag [#allocation10], 1
    %1494 = vsyncpa %s1493, 1
    %1495 = vsyncpa [#allocation8], 1
    %s1496 = scalar_lea.sflag [#allocation8], 1
    %1497 = vsyncpa %s1496, 1

</llo_original>
